<compile_context>
chip_gen: v7x
topology: tpu7x:2x2x1
jax: 0.10.0
libtpu: 0.0.40
codegen_flags: <defaults>
</compile_context>

<pallas_src>
import jax
import jax.numpy as jnp
from jax import lax
from jax.experimental import pallas as pl
from jax.experimental.pallas import tpu as pltpu

# ---------------- model config (small, consistent with the module) -----------
B = 2            # batch
S = 8            # sequence length
D = 32           # d_model
H = 4            # num attention heads
DH = D // H      # head dim
DFF = 64         # feed-forward hidden dim
BS = B * S       # folded token-row count
LN_EPS = 1e-5    # torch.nn.LayerNorm default
NEG_BIG = -1e30  # additive mask for cross-batch attention entries


def _layernorm(y, gamma, beta):
    mu = jnp.mean(y, axis=-1, keepdims=True)
    var = jnp.mean((y - mu) * (y - mu), axis=-1, keepdims=True)
    return (y - mu) * lax.rsqrt(var + LN_EPS) * gamma + beta


def encoder_kernel(x_ref,
                   wqkv_ref, bqkv_ref, wo_ref, bo_ref,
                   w1_ref, b1_ref, w2_ref, b2_ref,
                   gamma_ref, beta_ref, bias_ref,
                   out_ref,
                   ctx_ref):
    # Whole problem in one invocation: x is the (B*S, D) token slab.
    x = x_ref[...].astype(jnp.float32)          # (BS, D)
    gamma = gamma_ref[...]                      # (1, D) -> broadcasts over rows
    beta = beta_ref[...]
    bias = bias_ref[...]                        # (BS, BS) block-diagonal bias

    # ---- fused Q/K/V projection: one matmul instead of three ----------------
    # 1/sqrt(DH) is pre-folded into the Q columns of wqkv/bqkv at init time.
    qkv = jnp.dot(x, wqkv_ref[...],
                  preferred_element_type=jnp.float32) + bqkv_ref[...]  # (BS, 3D)

    # q @ k^T without an explicit XLU transpose: contract dim 1 of both.
    dn_scores = (((1,), (1,)), ((), ()))

    # Per-head loop (H=4).  Each head processes ALL B*S rows at once; the
    # additive bias keeps attention block-diagonal over batches.  Head context
    # is stored directly into the VMEM scratch (no concatenates).
    for h in range(H):
        c0 = h * DH
        qh = qkv[:, c0:c0 + DH]                 # (BS, DH)
        kh = qkv[:, D + c0:D + c0 + DH]         # (BS, DH)
        vh = qkv[:, 2 * D + c0:2 * D + c0 + DH]  # (BS, DH)

        s = lax.dot_general(qh, kh, dn_scores,
                            preferred_element_type=jnp.float32) + bias  # (BS, BS)
        m = jnp.max(s, axis=-1, keepdims=True)
        e = jnp.exp(s - m)                      # masked entries underflow to 0
        p = e / jnp.sum(e, axis=-1, keepdims=True)
        ctx_ref[:, c0:c0 + DH] = jnp.dot(p, vh,
                                         preferred_element_type=jnp.float32)

    ctx = ctx_ref[...]                          # (BS, D), all columns written

    # Single output projection over all B*S rows.
    attn = jnp.dot(ctx, wo_ref[...],
                   preferred_element_type=jnp.float32) + bo_ref[...]

    # TODO(synk): dropout (p=0.1) is identity in eval mode; not applied here.

    # ---- residual + layernorm 1 ---------------------------------------------
    out1 = _layernorm(x + attn, gamma, beta)

    # ---- two-layer FFNN with ReLU -------------------------------------------
    h1 = jnp.dot(out1, w1_ref[...], preferred_element_type=jnp.float32) + b1_ref[...]
    h1 = jnp.maximum(h1, 0.0)
    ff = jnp.dot(h1, w2_ref[...], preferred_element_type=jnp.float32) + b2_ref[...]

    # ---- residual + layernorm 2 (same shared LayerNorm params) --------------
    out2 = _layernorm(out1 + ff, gamma, beta)

    # One contiguous (B*S, D) store (batch folded into rows).
    out_ref[...] = out2.astype(out_ref.dtype)


def encoder_forward(x, params):
    (wqkv, bqkv, wo, bo, w1, b1, w2, b2, gamma, beta) = params
    xf = x.reshape(BS, D)   # fold batch into rows outside the kernel

    # Additive block-diagonal attention bias: 0 within a batch, -1e30 across
    # batches.  Tiny (16x16) constant built once on the host side.
    row_b = jnp.arange(BS, dtype=jnp.int32) // S
    attn_bias = jnp.where(row_b[:, None] == row_b[None, :],
                          jnp.float32(0.0), jnp.float32(NEG_BIG))

    vmem_spec = pl.BlockSpec(memory_space=pltpu.MemorySpace.VMEM)
    out_flat = pl.pallas_call(
        encoder_kernel,
        out_shape=jax.ShapeDtypeStruct((BS, D), jnp.float32),
        # Gridless: every operand is VMEM-resident for the single invocation.
        in_specs=[vmem_spec] * 12,
        out_specs=vmem_spec,
        scratch_shapes=[pltpu.VMEM((BS, D), jnp.float32)],  # head-context slab
    )(xf, wqkv, bqkv, wo, bo, w1, b1, w2, b2, gamma, beta, attn_bias)
    return out_flat.reshape(B, S, D)


def init_params(key):
    ks = jax.random.split(key, 6)

    def lin(k, din, dout):
        w = jax.random.normal(k, (din, dout), jnp.float32) * 0.02
        b = jnp.zeros((1, dout), jnp.float32)
        return w, b

    wq, bq = lin(ks[0], D, D)
    wk, bk = lin(ks[1], D, D)
    wv, bv = lin(ks[2], D, D)
    wo, bo = lin(ks[3], D, D)
    w1, b1 = lin(ks[4], D, DFF)
    w2, b2 = lin(ks[5], DFF, D)
    gamma = jnp.ones((1, D), jnp.float32)
    beta = jnp.zeros((1, D), jnp.float32)

    # Pack Q/K/V into one fused projection; fold the 1/sqrt(DH) attention
    # scale into the Q columns (one-time parameter transform, zero runtime).
    scale = 1.0 / (DH ** 0.5)
    wqkv = jnp.concatenate([wq * scale, wk, wv], axis=1)     # (D, 3D)
    bqkv = jnp.concatenate([bq * scale, bk, bv], axis=1)     # (1, 3D)
    return (wqkv, bqkv, wo, bo, w1, b1, w2, b2, gamma, beta)


if __name__ == "__main__":
    key = jax.random.PRNGKey(0)
    kx, kp = jax.random.split(key)
    x = jax.random.normal(kx, (B, S, D), jnp.float32)
    params = init_params(kp)

    out = encoder_forward(x, params)
    jax.block_until_ready(out)
    assert out.shape == (B, S, D)
    assert bool(jnp.all(jnp.isfinite(out)))
    print("KERNEL_OK")
</pallas_src>

<mosaic_0001>
module attributes {stable_mosaic.version = 11 : i64} {
  func.func @encoder_kernel(%arg0: memref<16x32xf32, #tpu.memory_space<vmem>>, %arg1: memref<32x96xf32, #tpu.memory_space<vmem>>, %arg2: memref<1x96xf32, #tpu.memory_space<vmem>>, %arg3: memref<32x32xf32, #tpu.memory_space<vmem>>, %arg4: memref<1x32xf32, #tpu.memory_space<vmem>>, %arg5: memref<32x64xf32, #tpu.memory_space<vmem>>, %arg6: memref<1x64xf32, #tpu.memory_space<vmem>>, %arg7: memref<64x32xf32, #tpu.memory_space<vmem>>, %arg8: memref<1x32xf32, #tpu.memory_space<vmem>>, %arg9: memref<1x32xf32, #tpu.memory_space<vmem>>, %arg10: memref<1x32xf32, #tpu.memory_space<vmem>>, %arg11: memref<16x16xf32, #tpu.memory_space<vmem>>, %arg12: memref<16x32xf32, #tpu.memory_space<vmem>>, %arg13: memref<16x32xf32, #tpu.memory_space<vmem>>) attributes {dimension_semantics = [], scalar_prefetch = 0 : i64, scratch_operands = 1 : i64, tpu.core_type = #tpu.core_type<tc>} {
    %c0 = arith.constant 0 : index
    %c0_0 = arith.constant 0 : index
    %0 = vector.load %arg0[%c0, %c0_0] : memref<16x32xf32, #tpu.memory_space<vmem>>, vector<16x32xf32>
    %c0_1 = arith.constant 0 : index
    %c0_2 = arith.constant 0 : index
    %1 = vector.load %arg9[%c0_1, %c0_2] : memref<1x32xf32, #tpu.memory_space<vmem>>, vector<1x32xf32>
    %c0_3 = arith.constant 0 : index
    %c0_4 = arith.constant 0 : index
    %2 = vector.load %arg10[%c0_3, %c0_4] : memref<1x32xf32, #tpu.memory_space<vmem>>, vector<1x32xf32>
    %c0_5 = arith.constant 0 : index
    %c0_6 = arith.constant 0 : index
    %3 = vector.load %arg11[%c0_5, %c0_6] : memref<16x16xf32, #tpu.memory_space<vmem>>, vector<16x16xf32>
    %c0_7 = arith.constant 0 : index
    %c0_8 = arith.constant 0 : index
    %4 = vector.load %arg1[%c0_7, %c0_8] : memref<32x96xf32, #tpu.memory_space<vmem>>, vector<32x96xf32>
    %cst = arith.constant dense<0.000000e+00> : vector<16x96xf32>
    %5 = tpu.matmul %0, %4, %cst {dimension_numbers = #tpu.dot_dimension_numbers<[1], [0], [0], [1], [0, 0, 1, 1], [], []>} : vector<16x32xf32>, vector<32x96xf32>, vector<16x96xf32> -> vector<16x96xf32>
    %c0_9 = arith.constant 0 : index
    %c0_10 = arith.constant 0 : index
    %6 = vector.load %arg2[%c0_9, %c0_10] : memref<1x96xf32, #tpu.memory_space<vmem>>, vector<1x96xf32>
    %7 = vector.broadcast %6 : vector<1x96xf32> to vector<16x96xf32>
    %8 = arith.addf %5, %7 : vector<16x96xf32>
    %9 = vector.extract_strided_slice %8 {offsets = [0, 0], sizes = [16, 8], strides = [1, 1]} : vector<16x96xf32> to vector<16x8xf32>
    %10 = vector.extract_strided_slice %8 {offsets = [0, 32], sizes = [16, 8], strides = [1, 1]} : vector<16x96xf32> to vector<16x8xf32>
    %11 = vector.extract_strided_slice %8 {offsets = [0, 64], sizes = [16, 8], strides = [1, 1]} : vector<16x96xf32> to vector<16x8xf32>
    %cst_11 = arith.constant dense<0.000000e+00> : vector<16x16xf32>
    %12 = tpu.matmul %9, %10, %cst_11 {dimension_numbers = #tpu.dot_dimension_numbers<[1], [1], [0], [0], [0, 0, 1, 0], [], []>} : vector<16x8xf32>, vector<16x8xf32>, vector<16x16xf32> -> vector<16x16xf32>
    %13 = arith.addf %12, %3 : vector<16x16xf32>
    %cst_12 = arith.constant dense<0xFF800000> : vector<16xf32>
    %14 = vector.multi_reduction <maximumf>, %13, %cst_12 [1] : vector<16x16xf32> to vector<16xf32>
    %15 = vector.shape_cast %14 : vector<16xf32> to vector<16x1xf32>
    %16 = vector.broadcast %15 : vector<16x1xf32> to vector<16x16xf32>
    %17 = arith.subf %13, %16 : vector<16x16xf32>
    %18 = math.exp %17 : vector<16x16xf32>
    %cst_13 = arith.constant dense<0.000000e+00> : vector<16xf32>
    %19 = vector.multi_reduction <add>, %18, %cst_13 [1] : vector<16x16xf32> to vector<16xf32>
    %20 = vector.shape_cast %19 : vector<16xf32> to vector<16x1xf32>
    %21 = vector.broadcast %20 : vector<16x1xf32> to vector<16x16xf32>
    %22 = arith.divf %18, %21 : vector<16x16xf32>
    %cst_14 = arith.constant dense<0.000000e+00> : vector<16x8xf32>
    %23 = tpu.matmul %22, %11, %cst_14 {dimension_numbers = #tpu.dot_dimension_numbers<[1], [0], [0], [1], [0, 0, 1, 1], [], []>} : vector<16x16xf32>, vector<16x8xf32>, vector<16x8xf32> -> vector<16x8xf32>
    %c0_15 = arith.constant 0 : index
    %c0_16 = arith.constant 0 : index
    %24 = vector.load %arg13[%c0_15, %c0_16] : memref<16x32xf32, #tpu.memory_space<vmem>>, vector<16x8xf32>
    tpu.vector_store %arg13[%c0_15, %c0_16], %23 {strides = array<i32>} : memref<16x32xf32, #tpu.memory_space<vmem>>, vector<16x8xf32>,
    %25 = vector.extract_strided_slice %8 {offsets = [0, 8], sizes = [16, 8], strides = [1, 1]} : vector<16x96xf32> to vector<16x8xf32>
    %26 = vector.extract_strided_slice %8 {offsets = [0, 40], sizes = [16, 8], strides = [1, 1]} : vector<16x96xf32> to vector<16x8xf32>
    %27 = vector.extract_strided_slice %8 {offsets = [0, 72], sizes = [16, 8], strides = [1, 1]} : vector<16x96xf32> to vector<16x8xf32>
    %cst_17 = arith.constant dense<0.000000e+00> : vector<16x16xf32>
    %28 = tpu.matmul %25, %26, %cst_17 {dimension_numbers = #tpu.dot_dimension_numbers<[1], [1], [0], [0], [0, 0, 1, 0], [], []>} : vector<16x8xf32>, vector<16x8xf32>, vector<16x16xf32> -> vector<16x16xf32>
    %29 = arith.addf %28, %3 : vector<16x16xf32>
    %cst_18 = arith.constant dense<0xFF800000> : vector<16xf32>
    %30 = vector.multi_reduction <maximumf>, %29, %cst_18 [1] : vector<16x16xf32> to vector<16xf32>
    %31 = vector.shape_cast %30 : vector<16xf32> to vector<16x1xf32>
    %32 = vector.broadcast %31 : vector<16x1xf32> to vector<16x16xf32>
    %33 = arith.subf %29, %32 : vector<16x16xf32>
    %34 = math.exp %33 : vector<16x16xf32>
    %cst_19 = arith.constant dense<0.000000e+00> : vector<16xf32>
    %35 = vector.multi_reduction <add>, %34, %cst_19 [1] : vector<16x16xf32> to vector<16xf32>
    %36 = vector.shape_cast %35 : vector<16xf32> to vector<16x1xf32>
    %37 = vector.broadcast %36 : vector<16x1xf32> to vector<16x16xf32>
    %38 = arith.divf %34, %37 : vector<16x16xf32>
    %cst_20 = arith.constant dense<0.000000e+00> : vector<16x8xf32>
    %39 = tpu.matmul %38, %27, %cst_20 {dimension_numbers = #tpu.dot_dimension_numbers<[1], [0], [0], [1], [0, 0, 1, 1], [], []>} : vector<16x16xf32>, vector<16x8xf32>, vector<16x8xf32> -> vector<16x8xf32>
    %c0_21 = arith.constant 0 : index
    %c8 = arith.constant 8 : index
    %40 = vector.load %arg13[%c0_21, %c8] : memref<16x32xf32, #tpu.memory_space<vmem>>, vector<16x8xf32>
    tpu.vector_store %arg13[%c0_21, %c8], %39 {strides = array<i32>} : memref<16x32xf32, #tpu.memory_space<vmem>>, vector<16x8xf32>,
    %41 = vector.extract_strided_slice %8 {offsets = [0, 16], sizes = [16, 8], strides = [1, 1]} : vector<16x96xf32> to vector<16x8xf32>
    %42 = vector.extract_strided_slice %8 {offsets = [0, 48], sizes = [16, 8], strides = [1, 1]} : vector<16x96xf32> to vector<16x8xf32>
    %43 = vector.extract_strided_slice %8 {offsets = [0, 80], sizes = [16, 8], strides = [1, 1]} : vector<16x96xf32> to vector<16x8xf32>
    %cst_22 = arith.constant dense<0.000000e+00> : vector<16x16xf32>
    %44 = tpu.matmul %41, %42, %cst_22 {dimension_numbers = #tpu.dot_dimension_numbers<[1], [1], [0], [0], [0, 0, 1, 0], [], []>} : vector<16x8xf32>, vector<16x8xf32>, vector<16x16xf32> -> vector<16x16xf32>
    %45 = arith.addf %44, %3 : vector<16x16xf32>
    %cst_23 = arith.constant dense<0xFF800000> : vector<16xf32>
    %46 = vector.multi_reduction <maximumf>, %45, %cst_23 [1] : vector<16x16xf32> to vector<16xf32>
    %47 = vector.shape_cast %46 : vector<16xf32> to vector<16x1xf32>
    %48 = vector.broadcast %47 : vector<16x1xf32> to vector<16x16xf32>
    %49 = arith.subf %45, %48 : vector<16x16xf32>
    %50 = math.exp %49 : vector<16x16xf32>
    %cst_24 = arith.constant dense<0.000000e+00> : vector<16xf32>
    %51 = vector.multi_reduction <add>, %50, %cst_24 [1] : vector<16x16xf32> to vector<16xf32>
    %52 = vector.shape_cast %51 : vector<16xf32> to vector<16x1xf32>
    %53 = vector.broadcast %52 : vector<16x1xf32> to vector<16x16xf32>
    %54 = arith.divf %50, %53 : vector<16x16xf32>
    %cst_25 = arith.constant dense<0.000000e+00> : vector<16x8xf32>
    %55 = tpu.matmul %54, %43, %cst_25 {dimension_numbers = #tpu.dot_dimension_numbers<[1], [0], [0], [1], [0, 0, 1, 1], [], []>} : vector<16x16xf32>, vector<16x8xf32>, vector<16x8xf32> -> vector<16x8xf32>
    %c0_26 = arith.constant 0 : index
    %c16 = arith.constant 16 : index
    %56 = vector.load %arg13[%c0_26, %c16] : memref<16x32xf32, #tpu.memory_space<vmem>>, vector<16x8xf32>
    tpu.vector_store %arg13[%c0_26, %c16], %55 {strides = array<i32>} : memref<16x32xf32, #tpu.memory_space<vmem>>, vector<16x8xf32>,
    %57 = vector.extract_strided_slice %8 {offsets = [0, 24], sizes = [16, 8], strides = [1, 1]} : vector<16x96xf32> to vector<16x8xf32>
    %58 = vector.extract_strided_slice %8 {offsets = [0, 56], sizes = [16, 8], strides = [1, 1]} : vector<16x96xf32> to vector<16x8xf32>
    %59 = vector.extract_strided_slice %8 {offsets = [0, 88], sizes = [16, 8], strides = [1, 1]} : vector<16x96xf32> to vector<16x8xf32>
    %cst_27 = arith.constant dense<0.000000e+00> : vector<16x16xf32>
    %60 = tpu.matmul %57, %58, %cst_27 {dimension_numbers = #tpu.dot_dimension_numbers<[1], [1], [0], [0], [0, 0, 1, 0], [], []>} : vector<16x8xf32>, vector<16x8xf32>, vector<16x16xf32> -> vector<16x16xf32>
    %61 = arith.addf %60, %3 : vector<16x16xf32>
    %cst_28 = arith.constant dense<0xFF800000> : vector<16xf32>
    %62 = vector.multi_reduction <maximumf>, %61, %cst_28 [1] : vector<16x16xf32> to vector<16xf32>
    %63 = vector.shape_cast %62 : vector<16xf32> to vector<16x1xf32>
    %64 = vector.broadcast %63 : vector<16x1xf32> to vector<16x16xf32>
    %65 = arith.subf %61, %64 : vector<16x16xf32>
    %66 = math.exp %65 : vector<16x16xf32>
    %cst_29 = arith.constant dense<0.000000e+00> : vector<16xf32>
    %67 = vector.multi_reduction <add>, %66, %cst_29 [1] : vector<16x16xf32> to vector<16xf32>
    %68 = vector.shape_cast %67 : vector<16xf32> to vector<16x1xf32>
    %69 = vector.broadcast %68 : vector<16x1xf32> to vector<16x16xf32>
    %70 = arith.divf %66, %69 : vector<16x16xf32>
    %cst_30 = arith.constant dense<0.000000e+00> : vector<16x8xf32>
    %71 = tpu.matmul %70, %59, %cst_30 {dimension_numbers = #tpu.dot_dimension_numbers<[1], [0], [0], [1], [0, 0, 1, 1], [], []>} : vector<16x16xf32>, vector<16x8xf32>, vector<16x8xf32> -> vector<16x8xf32>
    %c0_31 = arith.constant 0 : index
    %c24 = arith.constant 24 : index
    %72 = vector.load %arg13[%c0_31, %c24] : memref<16x32xf32, #tpu.memory_space<vmem>>, vector<16x8xf32>
    tpu.vector_store %arg13[%c0_31, %c24], %71 {strides = array<i32>} : memref<16x32xf32, #tpu.memory_space<vmem>>, vector<16x8xf32>,
    %c0_32 = arith.constant 0 : index
    %c0_33 = arith.constant 0 : index
    %73 = vector.load %arg13[%c0_32, %c0_33] : memref<16x32xf32, #tpu.memory_space<vmem>>, vector<16x32xf32>
    %c0_34 = arith.constant 0 : index
    %c0_35 = arith.constant 0 : index
    %74 = vector.load %arg3[%c0_34, %c0_35] : memref<32x32xf32, #tpu.memory_space<vmem>>, vector<32x32xf32>
    %cst_36 = arith.constant dense<0.000000e+00> : vector<16x32xf32>
    %75 = tpu.matmul %73, %74, %cst_36 {dimension_numbers = #tpu.dot_dimension_numbers<[1], [0], [0], [1], [0, 0, 1, 1], [], []>} : vector<16x32xf32>, vector<32x32xf32>, vector<16x32xf32> -> vector<16x32xf32>
    %c0_37 = arith.constant 0 : index
    %c0_38 = arith.constant 0 : index
    %76 = vector.load %arg4[%c0_37, %c0_38] : memref<1x32xf32, #tpu.memory_space<vmem>>, vector<1x32xf32>
    %77 = vector.broadcast %76 : vector<1x32xf32> to vector<16x32xf32>
    %78 = arith.addf %75, %77 : vector<16x32xf32>
    %79 = arith.addf %0, %78 : vector<16x32xf32>
    %cst_39 = arith.constant dense<0.000000e+00> : vector<16xf32>
    %80 = vector.multi_reduction <add>, %79, %cst_39 [1] : vector<16x32xf32> to vector<16xf32>
    %81 = vector.shape_cast %80 : vector<16xf32> to vector<16x1xf32>
    %cst_40 = arith.constant 3.200000e+01 : f32
    %82 = vector.broadcast %cst_40 : f32 to vector<16x1xf32>
    %83 = arith.divf %81, %82 : vector<16x1xf32>
    %84 = vector.broadcast %83 : vector<16x1xf32> to vector<16x32xf32>
    %85 = arith.subf %79, %84 : vector<16x32xf32>
    %86 = vector.broadcast %83 : vector<16x1xf32> to vector<16x32xf32>
    %87 = arith.subf %79, %86 : vector<16x32xf32>
    %88 = arith.mulf %85, %87 : vector<16x32xf32>
    %cst_41 = arith.constant dense<0.000000e+00> : vector<16xf32>
    %89 = vector.multi_reduction <add>, %88, %cst_41 [1] : vector<16x32xf32> to vector<16xf32>
    %90 = vector.shape_cast %89 : vector<16xf32> to vector<16x1xf32>
    %cst_42 = arith.constant 3.200000e+01 : f32
    %91 = vector.broadcast %cst_42 : f32 to vector<16x1xf32>
    %92 = arith.divf %90, %91 : vector<16x1xf32>
    %93 = vector.broadcast %83 : vector<16x1xf32> to vector<16x32xf32>
    %94 = arith.subf %79, %93 : vector<16x32xf32>
    %cst_43 = arith.constant 9.99999974E-6 : f32
    %95 = vector.broadcast %cst_43 : f32 to vector<16x1xf32>
    %96 = arith.addf %92, %95 : vector<16x1xf32>
    %97 = math.rsqrt %96 : vector<16x1xf32>
    %98 = vector.broadcast %97 : vector<16x1xf32> to vector<16x32xf32>
    %99 = arith.mulf %94, %98 : vector<16x32xf32>
    %100 = vector.broadcast %1 : vector<1x32xf32> to vector<16x32xf32>
    %101 = arith.mulf %99, %100 : vector<16x32xf32>
    %102 = vector.broadcast %2 : vector<1x32xf32> to vector<16x32xf32>
    %103 = arith.addf %101, %102 : vector<16x32xf32>
    %c0_44 = arith.constant 0 : index
    %c0_45 = arith.constant 0 : index
    %104 = vector.load %arg5[%c0_44, %c0_45] : memref<32x64xf32, #tpu.memory_space<vmem>>, vector<32x64xf32>
    %cst_46 = arith.constant dense<0.000000e+00> : vector<16x64xf32>
    %105 = tpu.matmul %103, %104, %cst_46 {dimension_numbers = #tpu.dot_dimension_numbers<[1], [0], [0], [1], [0, 0, 1, 1], [], []>} : vector<16x32xf32>, vector<32x64xf32>, vector<16x64xf32> -> vector<16x64xf32>
    %c0_47 = arith.constant 0 : index
    %c0_48 = arith.constant 0 : index
    %106 = vector.load %arg6[%c0_47, %c0_48] : memref<1x64xf32, #tpu.memory_space<vmem>>, vector<1x64xf32>
    %107 = vector.broadcast %106 : vector<1x64xf32> to vector<16x64xf32>
    %108 = arith.addf %105, %107 : vector<16x64xf32>
    %cst_49 = arith.constant 0.000000e+00 : f32
    %109 = vector.broadcast %cst_49 : f32 to vector<16x64xf32>
    %110 = arith.maximumf %108, %109 : vector<16x64xf32>
    %c0_50 = arith.constant 0 : index
    %c0_51 = arith.constant 0 : index
    %111 = vector.load %arg7[%c0_50, %c0_51] : memref<64x32xf32, #tpu.memory_space<vmem>>, vector<64x32xf32>
    %cst_52 = arith.constant dense<0.000000e+00> : vector<16x32xf32>
    %112 = tpu.matmul %110, %111, %cst_52 {dimension_numbers = #tpu.dot_dimension_numbers<[1], [0], [0], [1], [0, 0, 1, 1], [], []>} : vector<16x64xf32>, vector<64x32xf32>, vector<16x32xf32> -> vector<16x32xf32>
    %c0_53 = arith.constant 0 : index
    %c0_54 = arith.constant 0 : index
    %113 = vector.load %arg8[%c0_53, %c0_54] : memref<1x32xf32, #tpu.memory_space<vmem>>, vector<1x32xf32>
    %114 = vector.broadcast %113 : vector<1x32xf32> to vector<16x32xf32>
    %115 = arith.addf %112, %114 : vector<16x32xf32>
    %116 = arith.addf %103, %115 : vector<16x32xf32>
    %cst_55 = arith.constant dense<0.000000e+00> : vector<16xf32>
    %117 = vector.multi_reduction <add>, %116, %cst_55 [1] : vector<16x32xf32> to vector<16xf32>
    %118 = vector.shape_cast %117 : vector<16xf32> to vector<16x1xf32>
    %cst_56 = arith.constant 3.200000e+01 : f32
    %119 = vector.broadcast %cst_56 : f32 to vector<16x1xf32>
    %120 = arith.divf %118, %119 : vector<16x1xf32>
    %121 = vector.broadcast %120 : vector<16x1xf32> to vector<16x32xf32>
    %122 = arith.subf %116, %121 : vector<16x32xf32>
    %123 = vector.broadcast %120 : vector<16x1xf32> to vector<16x32xf32>
    %124 = arith.subf %116, %123 : vector<16x32xf32>
    %125 = arith.mulf %122, %124 : vector<16x32xf32>
    %cst_57 = arith.constant dense<0.000000e+00> : vector<16xf32>
    %126 = vector.multi_reduction <add>, %125, %cst_57 [1] : vector<16x32xf32> to vector<16xf32>
    %127 = vector.shape_cast %126 : vector<16xf32> to vector<16x1xf32>
    %cst_58 = arith.constant 3.200000e+01 : f32
    %128 = vector.broadcast %cst_58 : f32 to vector<16x1xf32>
    %129 = arith.divf %127, %128 : vector<16x1xf32>
    %130 = vector.broadcast %120 : vector<16x1xf32> to vector<16x32xf32>
    %131 = arith.subf %116, %130 : vector<16x32xf32>
    %cst_59 = arith.constant 9.99999974E-6 : f32
    %132 = vector.broadcast %cst_59 : f32 to vector<16x1xf32>
    %133 = arith.addf %129, %132 : vector<16x1xf32>
    %134 = math.rsqrt %133 : vector<16x1xf32>
    %135 = vector.broadcast %134 : vector<16x1xf32> to vector<16x32xf32>
    %136 = arith.mulf %131, %135 : vector<16x32xf32>
    %137 = vector.broadcast %1 : vector<1x32xf32> to vector<16x32xf32>
    %138 = arith.mulf %136, %137 : vector<16x32xf32>
    %139 = vector.broadcast %2 : vector<1x32xf32> to vector<16x32xf32>
    %140 = arith.addf %138, %139 : vector<16x32xf32>
    %c0_60 = arith.constant 0 : index
    %c0_61 = arith.constant 0 : index
    %141 = vector.load %arg12[%c0_60, %c0_61] : memref<16x32xf32, #tpu.memory_space<vmem>>, vector<16x32xf32>
    tpu.vector_store %arg12[%c0_60, %c0_61], %140 {strides = array<i32>} : memref<16x32xf32, #tpu.memory_space<vmem>>, vector<16x32xf32>,
    return
  }
}

</mosaic_0001>

<llo_original>
// kernel: tpu_custom_call.1
$region0: #{tpu_custom_call.1}
  #allocation0 [shape = 'u32[]', space=smem, size = 0x4, offset = 0x4, fixed_abs, tag = 'smem constant byte address 0x4 - core index']
  #allocation1 [shape = 'u32[144,128]{1,0:T(1,128)}', space=vmem, size = 0x12000, scoped, tag = 'internal scratch']
  #allocation2 [shape = 'f32[16,32]{1,0:T(8,128)}', space=vmem, size = 0x2000, scoped, tag = 'scratch operand']
  %s0 = inlined_call_operand.hbm [shape: f32[16,32], index: 0, kind: input, shape index: {}]
  %s1 = inlined_call_operand.vmem [shape: f32[32,96], index: 1, kind: input, shape index: {}]
  %s2 = inlined_call_operand.vmem [shape: f32[1,96], index: 2, kind: input, shape index: {}]
  %s3 = inlined_call_operand.vmem [shape: f32[32,32], index: 3, kind: input, shape index: {}]
  %s4 = inlined_call_operand.vmem [shape: f32[1,32], index: 4, kind: input, shape index: {}]
  %s5 = inlined_call_operand.vmem [shape: f32[32,64], index: 5, kind: input, shape index: {}]
  %s6 = inlined_call_operand.vmem [shape: f32[1,64], index: 6, kind: input, shape index: {}]
  %s7 = inlined_call_operand.vmem [shape: f32[64,32], index: 7, kind: input, shape index: {}]
  %s8 = inlined_call_operand.vmem [shape: f32[1,32], index: 8, kind: input, shape index: {}]
  %s9 = inlined_call_operand.vmem [shape: f32[1,32], index: 9, kind: input, shape index: {}]
  %s10 = inlined_call_operand.vmem [shape: f32[1,32], index: 10, kind: input, shape index: {}]
  %s11 = inlined_call_operand.vmem [shape: f32[16,16], index: 11, kind: input, shape index: {}]
  %s12 = inlined_call_operand.hbm [shape: f32[16,32], index: 12, kind: output, shape index: {}]
  %s13 = sld [smem:[#allocation0]]
  $region62: #{tpu_custom_call.1} parent=0
    _
  %s15 = ssub.s32 1, %s13
  %s16 = scalar_select 0, %s15, %s13
  $region1: #{tpu_custom_call.1} parent=0
    #allocation3 [shape = 'u8[8192]{0}', space=vmem, size = 0x2000, scoped, tag = 'input window, operand 0, single buffered']
    #allocation4 [shape = 's32[1]{0}', space=sflag, size = 0x4, scoped, tag = 'scoped memory for tpu_custom_call.1']
    #allocation5 [shape = 's32[1]{0}', space=sflag, size = 0x4, scoped, tag = 'scoped memory for tpu_custom_call.1']
    #allocation6 [shape = 'u8[8192]{0}', space=vmem, size = 0x2000, scoped, tag = 'output window, operand 0, single buffered']
    %17 = vsyncpa [#allocation4], 0
    %18 = vsyncpa [#allocation5], 0
    // Predicated region
    $region2: #{tpu_custom_call.1} parent=1 // pred_check
      _
    $region3: #{tpu_custom_call.1} parent=1 // pred_check_branch
      %20 = sbr.rel (0) target = $region5
    $region4: #{tpu_custom_call.1} parent=1 // pred_region
      %s22 = ssub.s32 256, 256
      %23 = vsyncadd [#allocation4], %s22
      %s24 = sshll.u32 [#allocation3], 4
      %s25 = int_to_ptr.vmem [resolvable:$true] %s24
      %30 = dma.hbm_to_vmem [thread:$0]  %s0, 256, %s25, [#allocation4], 128, 128, 8
    $region5: #{tpu_custom_call.1} parent=1 // pred_fallthru
      _
    // Predicated region
    $region6: #{tpu_custom_call.1} parent=1 // pred_check
      _
    $region7: #{tpu_custom_call.1} parent=1 // pred_check_branch
      %32 = sbr.rel (0) target = $region9
    $region8: #{tpu_custom_call.1} parent=1 // pred_region
      _
    $region9: #{tpu_custom_call.1} parent=1 // pred_fallthru
      _
    // Predicated region
    $region10: #{tpu_custom_call.1} parent=1 // pred_check
      _
    $region11: #{tpu_custom_call.1} parent=1 // pred_check_branch
      %34 = sbr.rel (0) target = $region13
    $region12: #{tpu_custom_call.1} parent=1 // pred_region
      _
    $region13: #{tpu_custom_call.1} parent=1 // pred_fallthru
      _
    // Predicated region
    $region14: #{tpu_custom_call.1} parent=1 // pred_check
      _
    $region15: #{tpu_custom_call.1} parent=1 // pred_check_branch
      %36 = sbr.rel (0) target = $region17
    $region16: #{tpu_custom_call.1} parent=1 // pred_region
      _
    $region17: #{tpu_custom_call.1} parent=1 // pred_fallthru
      _
    // Predicated region
    $region18: #{tpu_custom_call.1} parent=1 // pred_check
      _
    $region19: #{tpu_custom_call.1} parent=1 // pred_check_branch
      %38 = sbr.rel (0) target = $region21
    $region20: #{tpu_custom_call.1} parent=1 // pred_region
      _
    $region21: #{tpu_custom_call.1} parent=1 // pred_fallthru
      _
    // Predicated region
    $region22: #{tpu_custom_call.1} parent=1 // pred_check
      _
    $region23: #{tpu_custom_call.1} parent=1 // pred_check_branch
      %40 = sbr.rel (0) target = $region25
    $region24: #{tpu_custom_call.1} parent=1 // pred_region
      _
    $region25: #{tpu_custom_call.1} parent=1 // pred_fallthru
      _
    // Predicated region
    $region26: #{tpu_custom_call.1} parent=1 // pred_check
      _
    $region27: #{tpu_custom_call.1} parent=1 // pred_check_branch
      %42 = sbr.rel (0) target = $region29
    $region28: #{tpu_custom_call.1} parent=1 // pred_region
      _
    $region29: #{tpu_custom_call.1} parent=1 // pred_fallthru
      _
    // Predicated region
    $region30: #{tpu_custom_call.1} parent=1 // pred_check
      _
    $region31: #{tpu_custom_call.1} parent=1 // pred_check_branch
      %44 = sbr.rel (0) target = $region33
    $region32: #{tpu_custom_call.1} parent=1 // pred_region
      _
    $region33: #{tpu_custom_call.1} parent=1 // pred_fallthru
      _
    // Predicated region
    $region34: #{tpu_custom_call.1} parent=1 // pred_check
      _
    $region35: #{tpu_custom_call.1} parent=1 // pred_check_branch
      %46 = sbr.rel (0) target = $region37
    $region36: #{tpu_custom_call.1} parent=1 // pred_region
      _
    $region37: #{tpu_custom_call.1} parent=1 // pred_fallthru
      _
    // Predicated region
    $region38: #{tpu_custom_call.1} parent=1 // pred_check
      _
    $region39: #{tpu_custom_call.1} parent=1 // pred_check_branch
      %48 = sbr.rel (0) target = $region41
    $region40: #{tpu_custom_call.1} parent=1 // pred_region
      _
    $region41: #{tpu_custom_call.1} parent=1 // pred_fallthru
      _
    // Predicated region
    $region42: #{tpu_custom_call.1} parent=1 // pred_check
      _
    $region43: #{tpu_custom_call.1} parent=1 // pred_check_branch
      %50 = sbr.rel (0) target = $region45
    $region44: #{tpu_custom_call.1} parent=1 // pred_region
      _
    $region45: #{tpu_custom_call.1} parent=1 // pred_fallthru
      _
    // Predicated region
    $region46: #{tpu_custom_call.1} parent=1 // pred_check
      _
    $region47: #{tpu_custom_call.1} parent=1 // pred_check_branch
      %52 = sbr.rel (0) target = $region49
    $region48: #{tpu_custom_call.1} parent=1 // pred_region
      _
    $region49: #{tpu_custom_call.1} parent=1 // pred_fallthru
      _
    // Predicated region
    $region50: #{tpu_custom_call.1} parent=1 // pred_check
      _
    $region51: #{tpu_custom_call.1} parent=1 // pred_check_branch
      %54 = sbr.rel (0) target = $region53
    $region52: #{tpu_custom_call.1} parent=1 // pred_region
      %55 = dma.done [#allocation4], 256
    $region53: #{tpu_custom_call.1} parent=1 // pred_fallthru
      _
    %v56 = vld [vmem:[#allocation3] sm:$0xff]
    %v57 = vld [vmem:[#allocation3 + $0x8] sm:$0xff]
    %v58 = vld [vmem:[%s9] sm:$0x1]
    %v59 = vld [vmem:[%s10] sm:$0x1]
    %v60 = vld [vmem:[%s11] sm:$0xff]
    %v61 = vld [vmem:[%s11 + $0x8] sm:$0xff]
    %v62 = vld [vmem:[%s1] sm:$0xff]
    %v63 = vld [vmem:[%s1 + $0x8] sm:$0xff]
    %v64 = vld [vmem:[%s1 + $0x10] sm:$0xff]
    %v65 = vld [vmem:[%s1 + $0x18] sm:$0xff]
    %v66 = vld [vmem:[%s2] sm:$0x1]
    %v68 = vlaneseq
    %v69 = vshrl.u32 %v68, 7
    %v70 = vsub.s32 0, %v69
    %v71 = vrot.slane %v66, %v70
    %vm73 = vcmask 261120
    %v75 = vsel %vm73, %v56, 0
    %v78 = vsel %vm73, %v57, 0
    %80 = vmatprep.subr.mxu0 0.0
    %81 = vmatpush1.msra.mxu0 %v62
    %82 = vmatprep.subr.mxu0 0.0
    %83 = vmatpush1.msra.mxu0 %v63
    %84 = vmatprep.subr.mxu0 0.0
    %85 = vmatpush1.msra.mxu0 %v64
    %86 = vmatprep.subr.mxu0 0.0
    %87 = vmatpush1.msra.mxu0 %v65
    %88 = vmatprep.subr.mxu0 0.0
    %89 = vmatpush1.msra.mxu0 0.0
    %90 = vmatprep.subr.mxu0 0.0
    %91 = vmatpush1.msra.mxu0 0.0
    %92 = vmatprep.subr.mxu0 0.0
    %93 = vmatpush1.msra.mxu0 0.0
    %94 = vmatprep.subr.mxu0 0.0
    %95 = vmatpush1.msra.mxu0 0.0
    %96 = vmatprep.subr.mxu0 0.0
    %97 = vmatpush1.msra.mxu0 0.0
    %98 = vmatprep.subr.mxu0 0.0
    %99 = vmatpush1.msra.mxu0 0.0
    %100 = vmatprep.subr.mxu0 0.0
    %101 = vmatpush1.msra.mxu0 0.0
    %102 = vmatprep.subr.mxu0 0.0
    %103 = vmatpush1.msra.mxu0 0.0
    %104 = vmatprep.subr.mxu0 0.0
    %105 = vmatpush1.msra.mxu0 0.0
    %106 = vmatprep.subr.mxu0 0.0
    %107 = vmatpush1.msra.mxu0 0.0
    %108 = vmatprep.subr.mxu0 0.0
    %109 = vmatpush1.msra.mxu0 0.0
    %110 = vmatprep.subr.mxu0 0.0
    %111 = vmatpush1.msra.mxu0 0.0
    %112 = vmatprep.subr.mxu0 0.0
    %113 = vmatpush1.msra.mxu0 0.0
    %114 = vmatprep.subr.mxu0 0.0
    %115 = vmatpush1.msra.mxu0 0.0
    %116 = vmatprep.subr.mxu0 0.0
    %117 = vmatpush1.msra.mxu0 0.0
    %118 = vmatprep.subr.mxu0 0.0
    %119 = vmatpush1.msra.mxu0 0.0
    %120 = vmatprep.subr.mxu0 0.0
    %121 = vmatpush1.msra.mxu0 0.0
    %122 = vmatprep.subr.mxu0 0.0
    %123 = vmatpush1.msra.mxu0 0.0
    %124 = vmatprep.subr.mxu0 0.0
    %125 = vmatpush1.msra.mxu0 0.0
    %126 = vmatprep.subr.mxu0 0.0
    %127 = vmatpush1.msra.mxu0 0.0
    %128 = vmatprep.subr.mxu0 0.0
    %129 = vmatpush1.msra.mxu0 0.0
    %130 = vmatprep.subr.mxu0 0.0
    %131 = vmatpush1.msra.mxu0 0.0
    %132 = vmatprep.subr.mxu0 0.0
    %133 = vmatpush1.msra.mxu0 0.0
    %134 = vmatprep.subr.mxu0 0.0
    %135 = vmatpush1.msra.mxu0 0.0
    %136 = vmatprep.subr.mxu0 0.0
    %137 = vmatpush1.msra.mxu0 0.0
    %138 = vmatprep.subr.mxu0 0.0
    %139 = vmatpush1.msra.mxu0 0.0
    %140 = vmatprep.subr.mxu0 0.0
    %141 = vmatpush1.msra.mxu0 0.0
    %142 = vmatprep.subr.mxu0 0.0
    %143 = vmatpush1.msra.mxu0 0.0
    %144 = vmatprep.mubr.f32.mxu0 0.0
    %145 = vmatmul.mubr.f32.gmra.mrb[0].mxu0 %v75
    %v146 = vpop.f32.mrb[0].mxu0
    %v147 = vadd.f32 %v71, %v146
    %v148 = vpop.f32.mrb[0].mxu0
    %149 = vmatprep.mubr.f32.mxu0 0.0
    %150 = vmatmul.mubr.f32.gmra.mrb[0].mxu0 %v78
    %v151 = vpop.f32.mrb[0].mxu0
    %v152 = vadd.f32 %v71, %v151
    %v153 = vpop.f32.mrb[0].mxu0
    %154 = vdwg.mxu0
    %157 = vrot.lane.b32.xlu0 %v147, 96
    %v158 = vpop.permute.xlu0 %157
    %159 = vrot.lane.b32.xlu0 %v152, 96
    %v160 = vpop.permute.xlu0 %159
    %vm161 = vcmask 64512
    %v162 = vsel %vm161, %v147, 0
    %v164 = vsel %vm161, %v152, 0
    %v166 = vsel %vm161, %v158, 0
    %v168 = vsel %vm161, %v160, 0
    %170 = vmatprep.subr.mxu0 0.0
    %171 = vmatpush1.xpose.msra.mxu0 %v166
    %172 = vmatprep.subr.mxu0 0.0
    %173 = vmatpush1.xpose.msra.mxu0 %v168
    %174 = vmatprep.subr.mxu0 0.0
    %175 = vmatpush1.xpose.msra.mxu0 0.0
    %176 = vmatprep.subr.mxu0 0.0
    %177 = vmatpush1.xpose.msra.mxu0 0.0
    %178 = vmatprep.subr.mxu0 0.0
    %179 = vmatpush1.xpose.msra.mxu0 0.0
    %180 = vmatprep.subr.mxu0 0.0
    %181 = vmatpush1.xpose.msra.mxu0 0.0
    %182 = vmatprep.subr.mxu0 0.0
    %183 = vmatpush1.xpose.msra.mxu0 0.0
    %184 = vmatprep.subr.mxu0 0.0
    %185 = vmatpush1.xpose.msra.mxu0 0.0
    %186 = vmatprep.subr.mxu0 0.0
    %187 = vmatpush1.xpose.msra.mxu0 0.0
    %188 = vmatprep.subr.mxu0 0.0
    %189 = vmatpush1.xpose.msra.mxu0 0.0
    %190 = vmatprep.subr.mxu0 0.0
    %191 = vmatpush1.xpose.msra.mxu0 0.0
    %192 = vmatprep.subr.mxu0 0.0
    %193 = vmatpush1.xpose.msra.mxu0 0.0
    %194 = vmatprep.subr.mxu0 0.0
    %195 = vmatpush1.xpose.msra.mxu0 0.0
    %196 = vmatprep.subr.mxu0 0.0
    %197 = vmatpush1.xpose.msra.mxu0 0.0
    %198 = vmatprep.subr.mxu0 0.0
    %199 = vmatpush1.xpose.msra.mxu0 0.0
    %200 = vmatprep.subr.mxu0 0.0
    %201 = vmatpush1.xpose.msra.mxu0 0.0
    %202 = vmatprep.subr.mxu0 0.0
    %203 = vmatpush1.xpose.msra.mxu0 0.0
    %204 = vmatprep.subr.mxu0 0.0
    %205 = vmatpush1.xpose.msra.mxu0 0.0
    %206 = vmatprep.subr.mxu0 0.0
    %207 = vmatpush1.xpose.msra.mxu0 0.0
    %208 = vmatprep.subr.mxu0 0.0
    %209 = vmatpush1.xpose.msra.mxu0 0.0
    %210 = vmatprep.subr.mxu0 0.0
    %211 = vmatpush1.xpose.msra.mxu0 0.0
    %212 = vmatprep.subr.mxu0 0.0
    %213 = vmatpush1.xpose.msra.mxu0 0.0
    %214 = vmatprep.subr.mxu0 0.0
    %215 = vmatpush1.xpose.msra.mxu0 0.0
    %216 = vmatprep.subr.mxu0 0.0
    %217 = vmatpush1.xpose.msra.mxu0 0.0
    %218 = vmatprep.subr.mxu0 0.0
    %219 = vmatpush1.xpose.msra.mxu0 0.0
    %220 = vmatprep.subr.mxu0 0.0
    %221 = vmatpush1.xpose.msra.mxu0 0.0
    %222 = vmatprep.subr.mxu0 0.0
    %223 = vmatpush1.xpose.msra.mxu0 0.0
    %224 = vmatprep.subr.mxu0 0.0
    %225 = vmatpush1.xpose.msra.mxu0 0.0
    %226 = vmatprep.subr.mxu0 0.0
    %227 = vmatpush1.xpose.msra.mxu0 0.0
    %228 = vmatprep.subr.mxu0 0.0
    %229 = vmatpush1.xpose.msra.mxu0 0.0
    %230 = vmatprep.subr.mxu0 0.0
    %231 = vmatpush1.xpose.msra.mxu0 0.0
    %232 = vmatprep.subr.mxu0 0.0
    %233 = vmatpush1.xpose.msra.mxu0 0.0
    %234 = vmatprep.mubr.f32.mxu0 0.0
    %235 = vmatmul.mubr.f32.gmra.mrb[0].mxu0 %v162
    %v236 = vpop.f32.mrb[0].mxu0
    %v237 = vadd.f32 %v60, %v236
    %v238 = vpop.f32.mrb[0].mxu0
    %239 = vmatprep.mubr.f32.mxu0 0.0
    %240 = vmatmul.mubr.f32.gmra.mrb[0].mxu0 %v164
    %v241 = vpop.f32.mrb[0].mxu0
    %v242 = vadd.f32 %v61, %v241
    %v243 = vpop.f32.mrb[0].mxu0
    %244 = vdwg.mxu0
    %vm245 = vcmask 130048
    %v246 = vsel %vm245, %v237, -inf
    %247 = vmax.xlane.f32.xlu0 %v246
    %v248 = vpop.xlane.xlu0 %247
    %v249 = vsel %vm245, %v242, -inf
    %250 = vmax.xlane.f32.xlu0 %v249
    %v251 = vpop.xlane.xlu0 %250
    %v252 = vsub.f32 %v237, %v248
    %v253 = vsub.f32 %v242, %v251
    %v254 = vmul.f32 %v252, 1.442695
    %v255 = vpow.pop %v254
    %v256 = vmul.f32 %v253, 1.442695
    %v257 = vpow.pop %v256
    %v258 = vsel %vm245, %v255, 0.0
    %259 = vadd.xlane.f32.xlu0 %v258
    %v260 = vpop.xlane.xlu0 %259
    %v261 = vsel %vm245, %v257, 0.0
    %262 = vadd.xlane.f32.xlu0 %v261
    %v263 = vpop.xlane.xlu0 %262
    %v264 = vrcp.pop %v260
    %v265 = vmul.f32 %v255, %v264
    %v266 = vrcp.pop %v263
    %v267 = vmul.f32 %v257, %v266
    %268 = vrot.lane.b32.xlu0 %v147, 64
    %v269 = vpop.permute.xlu0 %268
    %270 = vrot.lane.b32.xlu0 %v152, 64
    %v271 = vpop.permute.xlu0 %270
    %v275 = vsel %vm245, %v265, 0
    %v278 = vsel %vm245, %v267, 0
    %280 = vmatprep.subr.mxu0 0.0
    %281 = vmatpush1.msra.mxu0 %v269
    %282 = vmatprep.subr.mxu0 0.0
    %283 = vmatpush1.msra.mxu0 %v271
    %284 = vmatprep.subr.mxu0 0.0
    %285 = vmatpush1.msra.mxu0 0.0
    %286 = vmatprep.subr.mxu0 0.0
    %287 = vmatpush1.msra.mxu0 0.0
    %288 = vmatprep.subr.mxu0 0.0
    %289 = vmatpush1.msra.mxu0 0.0
    %290 = vmatprep.subr.mxu0 0.0
    %291 = vmatpush1.msra.mxu0 0.0
    %292 = vmatprep.subr.mxu0 0.0
    %293 = vmatpush1.msra.mxu0 0.0
    %294 = vmatprep.subr.mxu0 0.0
    %295 = vmatpush1.msra.mxu0 0.0
    %296 = vmatprep.subr.mxu0 0.0
    %297 = vmatpush1.msra.mxu0 0.0
    %298 = vmatprep.subr.mxu0 0.0
    %299 = vmatpush1.msra.mxu0 0.0
    %300 = vmatprep.subr.mxu0 0.0
    %301 = vmatpush1.msra.mxu0 0.0
    %302 = vmatprep.subr.mxu0 0.0
    %303 = vmatpush1.msra.mxu0 0.0
    %304 = vmatprep.subr.mxu0 0.0
    %305 = vmatpush1.msra.mxu0 0.0
    %306 = vmatprep.subr.mxu0 0.0
    %307 = vmatpush1.msra.mxu0 0.0
    %308 = vmatprep.subr.mxu0 0.0
    %309 = vmatpush1.msra.mxu0 0.0
    %310 = vmatprep.subr.mxu0 0.0
    %311 = vmatpush1.msra.mxu0 0.0
    %312 = vmatprep.subr.mxu0 0.0
    %313 = vmatpush1.msra.mxu0 0.0
    %314 = vmatprep.subr.mxu0 0.0
    %315 = vmatpush1.msra.mxu0 0.0
    %316 = vmatprep.subr.mxu0 0.0
    %317 = vmatpush1.msra.mxu0 0.0
    %318 = vmatprep.subr.mxu0 0.0
    %319 = vmatpush1.msra.mxu0 0.0
    %320 = vmatprep.subr.mxu0 0.0
    %321 = vmatpush1.msra.mxu0 0.0
    %322 = vmatprep.subr.mxu0 0.0
    %323 = vmatpush1.msra.mxu0 0.0
    %324 = vmatprep.subr.mxu0 0.0
    %325 = vmatpush1.msra.mxu0 0.0
    %326 = vmatprep.subr.mxu0 0.0
    %327 = vmatpush1.msra.mxu0 0.0
    %328 = vmatprep.subr.mxu0 0.0
    %329 = vmatpush1.msra.mxu0 0.0
    %330 = vmatprep.subr.mxu0 0.0
    %331 = vmatpush1.msra.mxu0 0.0
    %332 = vmatprep.subr.mxu0 0.0
    %333 = vmatpush1.msra.mxu0 0.0
    %334 = vmatprep.subr.mxu0 0.0
    %335 = vmatpush1.msra.mxu0 0.0
    %336 = vmatprep.subr.mxu0 0.0
    %337 = vmatpush1.msra.mxu0 0.0
    %338 = vmatprep.subr.mxu0 0.0
    %339 = vmatpush1.msra.mxu0 0.0
    %340 = vmatprep.subr.mxu0 0.0
    %341 = vmatpush1.msra.mxu0 0.0
    %342 = vmatprep.subr.mxu0 0.0
    %343 = vmatpush1.msra.mxu0 0.0
    %344 = vmatprep.mubr.f32.mxu0 0.0
    %345 = vmatmul.mubr.f32.gmra.mrb[0].mxu0 %v275
    %v346 = vpop.f32.mrb[0].mxu0
    %v347 = vadd.f32 0.0, %v346
    %v348 = vpop.f32.mrb[0].mxu0
    %349 = vmatprep.mubr.f32.mxu0 0.0
    %350 = vmatmul.mubr.f32.gmra.mrb[0].mxu0 %v278
    %v351 = vpop.f32.mrb[0].mxu0
    %v352 = vadd.f32 0.0, %v351
    %v353 = vpop.f32.mrb[0].mxu0
    %354 = vdwg.mxu0
    %355 = vst.msk [vmem:[#allocation2] sm:$0xff] %vm161, %v347
    %356 = vst.msk [vmem:[#allocation2 + $0x8] sm:$0xff] %vm161, %v352
    %357 = vrot.lane.b32.xlu0 %v147, 120
    %v358 = vpop.permute.xlu0 %357
    %359 = vrot.lane.b32.xlu0 %v152, 120
    %v360 = vpop.permute.xlu0 %359
    %361 = vrot.lane.b32.xlu0 %v147, 88
    %v362 = vpop.permute.xlu0 %361
    %363 = vrot.lane.b32.xlu0 %v152, 88
    %v364 = vpop.permute.xlu0 %363
    %v365 = vsel %vm161, %v358, 0
    %v367 = vsel %vm161, %v360, 0
    %v369 = vsel %vm161, %v362, 0
    %v371 = vsel %vm161, %v364, 0
    %373 = vmatprep.subr.mxu0 0.0
    %374 = vmatpush1.xpose.msra.mxu0 %v369
    %375 = vmatprep.subr.mxu0 0.0
    %376 = vmatpush1.xpose.msra.mxu0 %v371
    %377 = vmatprep.subr.mxu0 0.0
    %378 = vmatpush1.xpose.msra.mxu0 0.0
    %379 = vmatprep.subr.mxu0 0.0
    %380 = vmatpush1.xpose.msra.mxu0 0.0
    %381 = vmatprep.subr.mxu0 0.0
    %382 = vmatpush1.xpose.msra.mxu0 0.0
    %383 = vmatprep.subr.mxu0 0.0
    %384 = vmatpush1.xpose.msra.mxu0 0.0
    %385 = vmatprep.subr.mxu0 0.0
    %386 = vmatpush1.xpose.msra.mxu0 0.0
    %387 = vmatprep.subr.mxu0 0.0
    %388 = vmatpush1.xpose.msra.mxu0 0.0
    %389 = vmatprep.subr.mxu0 0.0
    %390 = vmatpush1.xpose.msra.mxu0 0.0
    %391 = vmatprep.subr.mxu0 0.0
    %392 = vmatpush1.xpose.msra.mxu0 0.0
    %393 = vmatprep.subr.mxu0 0.0
    %394 = vmatpush1.xpose.msra.mxu0 0.0
    %395 = vmatprep.subr.mxu0 0.0
    %396 = vmatpush1.xpose.msra.mxu0 0.0
    %397 = vmatprep.subr.mxu0 0.0
    %398 = vmatpush1.xpose.msra.mxu0 0.0
    %399 = vmatprep.subr.mxu0 0.0
    %400 = vmatpush1.xpose.msra.mxu0 0.0
    %401 = vmatprep.subr.mxu0 0.0
    %402 = vmatpush1.xpose.msra.mxu0 0.0
    %403 = vmatprep.subr.mxu0 0.0
    %404 = vmatpush1.xpose.msra.mxu0 0.0
    %405 = vmatprep.subr.mxu0 0.0
    %406 = vmatpush1.xpose.msra.mxu0 0.0
    %407 = vmatprep.subr.mxu0 0.0
    %408 = vmatpush1.xpose.msra.mxu0 0.0
    %409 = vmatprep.subr.mxu0 0.0
    %410 = vmatpush1.xpose.msra.mxu0 0.0
    %411 = vmatprep.subr.mxu0 0.0
    %412 = vmatpush1.xpose.msra.mxu0 0.0
    %413 = vmatprep.subr.mxu0 0.0
    %414 = vmatpush1.xpose.msra.mxu0 0.0
    %415 = vmatprep.subr.mxu0 0.0
    %416 = vmatpush1.xpose.msra.mxu0 0.0
    %417 = vmatprep.subr.mxu0 0.0
    %418 = vmatpush1.xpose.msra.mxu0 0.0
    %419 = vmatprep.subr.mxu0 0.0
    %420 = vmatpush1.xpose.msra.mxu0 0.0
    %421 = vmatprep.subr.mxu0 0.0
    %422 = vmatpush1.xpose.msra.mxu0 0.0
    %423 = vmatprep.subr.mxu0 0.0
    %424 = vmatpush1.xpose.msra.mxu0 0.0
    %425 = vmatprep.subr.mxu0 0.0
    %426 = vmatpush1.xpose.msra.mxu0 0.0
    %427 = vmatprep.subr.mxu0 0.0
    %428 = vmatpush1.xpose.msra.mxu0 0.0
    %429 = vmatprep.subr.mxu0 0.0
    %430 = vmatpush1.xpose.msra.mxu0 0.0
    %431 = vmatprep.subr.mxu0 0.0
    %432 = vmatpush1.xpose.msra.mxu0 0.0
    %433 = vmatprep.subr.mxu0 0.0
    %434 = vmatpush1.xpose.msra.mxu0 0.0
    %435 = vmatprep.subr.mxu0 0.0
    %436 = vmatpush1.xpose.msra.mxu0 0.0
    %437 = vmatprep.mubr.f32.mxu0 0.0
    %438 = vmatmul.mubr.f32.gmra.mrb[0].mxu0 %v365
    %v439 = vpop.f32.mrb[0].mxu0
    %v440 = vadd.f32 %v60, %v439
    %v441 = vpop.f32.mrb[0].mxu0
    %442 = vmatprep.mubr.f32.mxu0 0.0
    %443 = vmatmul.mubr.f32.gmra.mrb[0].mxu0 %v367
    %v444 = vpop.f32.mrb[0].mxu0
    %v445 = vadd.f32 %v61, %v444
    %v446 = vpop.f32.mrb[0].mxu0
    %447 = vdwg.mxu0
    %v448 = vsel %vm245, %v440, -inf
    %449 = vmax.xlane.f32.xlu0 %v448
    %v450 = vpop.xlane.xlu0 %449
    %v451 = vsel %vm245, %v445, -inf
    %452 = vmax.xlane.f32.xlu0 %v451
    %v453 = vpop.xlane.xlu0 %452
    %v454 = vsub.f32 %v440, %v450
    %v455 = vsub.f32 %v445, %v453
    %v456 = vmul.f32 %v454, 1.442695
    %v457 = vpow.pop %v456
    %v458 = vmul.f32 %v455, 1.442695
    %v459 = vpow.pop %v458
    %v460 = vsel %vm245, %v457, 0.0
    %461 = vadd.xlane.f32.xlu0 %v460
    %v462 = vpop.xlane.xlu0 %461
    %v463 = vsel %vm245, %v459, 0.0
    %464 = vadd.xlane.f32.xlu0 %v463
    %v465 = vpop.xlane.xlu0 %464
    %v466 = vrcp.pop %v462
    %v467 = vmul.f32 %v457, %v466
    %v468 = vrcp.pop %v465
    %v469 = vmul.f32 %v459, %v468
    %470 = vrot.lane.b32.xlu0 %v147, 56
    %v471 = vpop.permute.xlu0 %470
    %472 = vrot.lane.b32.xlu0 %v152, 56
    %v473 = vpop.permute.xlu0 %472
    %v477 = vsel %vm245, %v467, 0
    %v480 = vsel %vm245, %v469, 0
    %482 = vmatprep.subr.mxu0 0.0
    %483 = vmatpush1.msra.mxu0 %v471
    %484 = vmatprep.subr.mxu0 0.0
    %485 = vmatpush1.msra.mxu0 %v473
    %486 = vmatprep.subr.mxu0 0.0
    %487 = vmatpush1.msra.mxu0 0.0
    %488 = vmatprep.subr.mxu0 0.0
    %489 = vmatpush1.msra.mxu0 0.0
    %490 = vmatprep.subr.mxu0 0.0
    %491 = vmatpush1.msra.mxu0 0.0
    %492 = vmatprep.subr.mxu0 0.0
    %493 = vmatpush1.msra.mxu0 0.0
    %494 = vmatprep.subr.mxu0 0.0
    %495 = vmatpush1.msra.mxu0 0.0
    %496 = vmatprep.subr.mxu0 0.0
    %497 = vmatpush1.msra.mxu0 0.0
    %498 = vmatprep.subr.mxu0 0.0
    %499 = vmatpush1.msra.mxu0 0.0
    %500 = vmatprep.subr.mxu0 0.0
    %501 = vmatpush1.msra.mxu0 0.0
    %502 = vmatprep.subr.mxu0 0.0
    %503 = vmatpush1.msra.mxu0 0.0
    %504 = vmatprep.subr.mxu0 0.0
    %505 = vmatpush1.msra.mxu0 0.0
    %506 = vmatprep.subr.mxu0 0.0
    %507 = vmatpush1.msra.mxu0 0.0
    %508 = vmatprep.subr.mxu0 0.0
    %509 = vmatpush1.msra.mxu0 0.0
    %510 = vmatprep.subr.mxu0 0.0
    %511 = vmatpush1.msra.mxu0 0.0
    %512 = vmatprep.subr.mxu0 0.0
    %513 = vmatpush1.msra.mxu0 0.0
    %514 = vmatprep.subr.mxu0 0.0
    %515 = vmatpush1.msra.mxu0 0.0
    %516 = vmatprep.subr.mxu0 0.0
    %517 = vmatpush1.msra.mxu0 0.0
    %518 = vmatprep.subr.mxu0 0.0
    %519 = vmatpush1.msra.mxu0 0.0
    %520 = vmatprep.subr.mxu0 0.0
    %521 = vmatpush1.msra.mxu0 0.0
    %522 = vmatprep.subr.mxu0 0.0
    %523 = vmatpush1.msra.mxu0 0.0
    %524 = vmatprep.subr.mxu0 0.0
    %525 = vmatpush1.msra.mxu0 0.0
    %526 = vmatprep.subr.mxu0 0.0
    %527 = vmatpush1.msra.mxu0 0.0
    %528 = vmatprep.subr.mxu0 0.0
    %529 = vmatpush1.msra.mxu0 0.0
    %530 = vmatprep.subr.mxu0 0.0
    %531 = vmatpush1.msra.mxu0 0.0
    %532 = vmatprep.subr.mxu0 0.0
    %533 = vmatpush1.msra.mxu0 0.0
    %534 = vmatprep.subr.mxu0 0.0
    %535 = vmatpush1.msra.mxu0 0.0
    %536 = vmatprep.subr.mxu0 0.0
    %537 = vmatpush1.msra.mxu0 0.0
    %538 = vmatprep.subr.mxu0 0.0
    %539 = vmatpush1.msra.mxu0 0.0
    %540 = vmatprep.subr.mxu0 0.0
    %541 = vmatpush1.msra.mxu0 0.0
    %542 = vmatprep.subr.mxu0 0.0
    %543 = vmatpush1.msra.mxu0 0.0
    %544 = vmatprep.subr.mxu0 0.0
    %545 = vmatpush1.msra.mxu0 0.0
    %546 = vmatprep.mubr.f32.mxu0 0.0
    %547 = vmatmul.mubr.f32.gmra.mrb[0].mxu0 %v477
    %v548 = vpop.f32.mrb[0].mxu0
    %v549 = vadd.f32 0.0, %v548
    %v550 = vpop.f32.mrb[0].mxu0
    %551 = vmatprep.mubr.f32.mxu0 0.0
    %552 = vmatmul.mubr.f32.gmra.mrb[0].mxu0 %v480
    %v553 = vpop.f32.mrb[0].mxu0
    %v554 = vadd.f32 0.0, %v553
    %v555 = vpop.f32.mrb[0].mxu0
    %556 = vdwg.mxu0
    %559 = vrot.lane.b32.xlu0 %v549, 8
    %v560 = vpop.permute.xlu0 %559
    %561 = vrot.lane.b32.xlu0 %v554, 8
    %v562 = vpop.permute.xlu0 %561
    %vm565 = vcmask 130112
    %566 = vst.msk [vmem:[#allocation2] sm:$0xff] %vm565, %v560
    %567 = vst.msk [vmem:[#allocation2 + $0x8] sm:$0xff] %vm565, %v562
    %568 = vrot.lane.b32.xlu0 %v147, 112
    %v569 = vpop.permute.xlu0 %568
    %570 = vrot.lane.b32.xlu0 %v152, 112
    %v571 = vpop.permute.xlu0 %570
    %572 = vrot.lane.b32.xlu0 %v147, 80
    %v573 = vpop.permute.xlu0 %572
    %574 = vrot.lane.b32.xlu0 %v152, 80
    %v575 = vpop.permute.xlu0 %574
    %v576 = vsel %vm161, %v569, 0
    %v578 = vsel %vm161, %v571, 0
    %v580 = vsel %vm161, %v573, 0
    %v582 = vsel %vm161, %v575, 0
    %584 = vmatprep.subr.mxu0 0.0
    %585 = vmatpush1.xpose.msra.mxu0 %v580
    %586 = vmatprep.subr.mxu0 0.0
    %587 = vmatpush1.xpose.msra.mxu0 %v582
    %588 = vmatprep.subr.mxu0 0.0
    %589 = vmatpush1.xpose.msra.mxu0 0.0
    %590 = vmatprep.subr.mxu0 0.0
    %591 = vmatpush1.xpose.msra.mxu0 0.0
    %592 = vmatprep.subr.mxu0 0.0
    %593 = vmatpush1.xpose.msra.mxu0 0.0
    %594 = vmatprep.subr.mxu0 0.0
    %595 = vmatpush1.xpose.msra.mxu0 0.0
    %596 = vmatprep.subr.mxu0 0.0
    %597 = vmatpush1.xpose.msra.mxu0 0.0
    %598 = vmatprep.subr.mxu0 0.0
    %599 = vmatpush1.xpose.msra.mxu0 0.0
    %600 = vmatprep.subr.mxu0 0.0
    %601 = vmatpush1.xpose.msra.mxu0 0.0
    %602 = vmatprep.subr.mxu0 0.0
    %603 = vmatpush1.xpose.msra.mxu0 0.0
    %604 = vmatprep.subr.mxu0 0.0
    %605 = vmatpush1.xpose.msra.mxu0 0.0
    %606 = vmatprep.subr.mxu0 0.0
    %607 = vmatpush1.xpose.msra.mxu0 0.0
    %608 = vmatprep.subr.mxu0 0.0
    %609 = vmatpush1.xpose.msra.mxu0 0.0
    %610 = vmatprep.subr.mxu0 0.0
    %611 = vmatpush1.xpose.msra.mxu0 0.0
    %612 = vmatprep.subr.mxu0 0.0
    %613 = vmatpush1.xpose.msra.mxu0 0.0
    %614 = vmatprep.subr.mxu0 0.0
    %615 = vmatpush1.xpose.msra.mxu0 0.0
    %616 = vmatprep.subr.mxu0 0.0
    %617 = vmatpush1.xpose.msra.mxu0 0.0
    %618 = vmatprep.subr.mxu0 0.0
    %619 = vmatpush1.xpose.msra.mxu0 0.0
    %620 = vmatprep.subr.mxu0 0.0
    %621 = vmatpush1.xpose.msra.mxu0 0.0
    %622 = vmatprep.subr.mxu0 0.0
    %623 = vmatpush1.xpose.msra.mxu0 0.0
    %624 = vmatprep.subr.mxu0 0.0
    %625 = vmatpush1.xpose.msra.mxu0 0.0
    %626 = vmatprep.subr.mxu0 0.0
    %627 = vmatpush1.xpose.msra.mxu0 0.0
    %628 = vmatprep.subr.mxu0 0.0
    %629 = vmatpush1.xpose.msra.mxu0 0.0
    %630 = vmatprep.subr.mxu0 0.0
    %631 = vmatpush1.xpose.msra.mxu0 0.0
    %632 = vmatprep.subr.mxu0 0.0
    %633 = vmatpush1.xpose.msra.mxu0 0.0
    %634 = vmatprep.subr.mxu0 0.0
    %635 = vmatpush1.xpose.msra.mxu0 0.0
    %636 = vmatprep.subr.mxu0 0.0
    %637 = vmatpush1.xpose.msra.mxu0 0.0
    %638 = vmatprep.subr.mxu0 0.0
    %639 = vmatpush1.xpose.msra.mxu0 0.0
    %640 = vmatprep.subr.mxu0 0.0
    %641 = vmatpush1.xpose.msra.mxu0 0.0
    %642 = vmatprep.subr.mxu0 0.0
    %643 = vmatpush1.xpose.msra.mxu0 0.0
    %644 = vmatprep.subr.mxu0 0.0
    %645 = vmatpush1.xpose.msra.mxu0 0.0
    %646 = vmatprep.subr.mxu0 0.0
    %647 = vmatpush1.xpose.msra.mxu0 0.0
    %648 = vmatprep.mubr.f32.mxu0 0.0
    %649 = vmatmul.mubr.f32.gmra.mrb[0].mxu0 %v576
    %v650 = vpop.f32.mrb[0].mxu0
    %v651 = vadd.f32 %v60, %v650
    %v652 = vpop.f32.mrb[0].mxu0
    %653 = vmatprep.mubr.f32.mxu0 0.0
    %654 = vmatmul.mubr.f32.gmra.mrb[0].mxu0 %v578
    %v655 = vpop.f32.mrb[0].mxu0
    %v656 = vadd.f32 %v61, %v655
    %v657 = vpop.f32.mrb[0].mxu0
    %658 = vdwg.mxu0
    %v659 = vsel %vm245, %v651, -inf
    %660 = vmax.xlane.f32.xlu0 %v659
    %v661 = vpop.xlane.xlu0 %660
    %v662 = vsel %vm245, %v656, -inf
    %663 = vmax.xlane.f32.xlu0 %v662
    %v664 = vpop.xlane.xlu0 %663
    %v665 = vsub.f32 %v651, %v661
    %v666 = vsub.f32 %v656, %v664
    %v667 = vmul.f32 %v665, 1.442695
    %v668 = vpow.pop %v667
    %v669 = vmul.f32 %v666, 1.442695
    %v670 = vpow.pop %v669
    %v671 = vsel %vm245, %v668, 0.0
    %672 = vadd.xlane.f32.xlu0 %v671
    %v673 = vpop.xlane.xlu0 %672
    %v674 = vsel %vm245, %v670, 0.0
    %675 = vadd.xlane.f32.xlu0 %v674
    %v676 = vpop.xlane.xlu0 %675
    %v677 = vrcp.pop %v673
    %v678 = vmul.f32 %v668, %v677
    %v679 = vrcp.pop %v676
    %v680 = vmul.f32 %v670, %v679
    %681 = vrot.lane.b32.xlu0 %v147, 48
    %v682 = vpop.permute.xlu0 %681
    %683 = vrot.lane.b32.xlu0 %v152, 48
    %v684 = vpop.permute.xlu0 %683
    %v688 = vsel %vm245, %v678, 0
    %v691 = vsel %vm245, %v680, 0
    %693 = vmatprep.subr.mxu0 0.0
    %694 = vmatpush1.msra.mxu0 %v682
    %695 = vmatprep.subr.mxu0 0.0
    %696 = vmatpush1.msra.mxu0 %v684
    %697 = vmatprep.subr.mxu0 0.0
    %698 = vmatpush1.msra.mxu0 0.0
    %699 = vmatprep.subr.mxu0 0.0
    %700 = vmatpush1.msra.mxu0 0.0
    %701 = vmatprep.subr.mxu0 0.0
    %702 = vmatpush1.msra.mxu0 0.0
    %703 = vmatprep.subr.mxu0 0.0
    %704 = vmatpush1.msra.mxu0 0.0
    %705 = vmatprep.subr.mxu0 0.0
    %706 = vmatpush1.msra.mxu0 0.0
    %707 = vmatprep.subr.mxu0 0.0
    %708 = vmatpush1.msra.mxu0 0.0
    %709 = vmatprep.subr.mxu0 0.0
    %710 = vmatpush1.msra.mxu0 0.0
    %711 = vmatprep.subr.mxu0 0.0
    %712 = vmatpush1.msra.mxu0 0.0
    %713 = vmatprep.subr.mxu0 0.0
    %714 = vmatpush1.msra.mxu0 0.0
    %715 = vmatprep.subr.mxu0 0.0
    %716 = vmatpush1.msra.mxu0 0.0
    %717 = vmatprep.subr.mxu0 0.0
    %718 = vmatpush1.msra.mxu0 0.0
    %719 = vmatprep.subr.mxu0 0.0
    %720 = vmatpush1.msra.mxu0 0.0
    %721 = vmatprep.subr.mxu0 0.0
    %722 = vmatpush1.msra.mxu0 0.0
    %723 = vmatprep.subr.mxu0 0.0
    %724 = vmatpush1.msra.mxu0 0.0
    %725 = vmatprep.subr.mxu0 0.0
    %726 = vmatpush1.msra.mxu0 0.0
    %727 = vmatprep.subr.mxu0 0.0
    %728 = vmatpush1.msra.mxu0 0.0
    %729 = vmatprep.subr.mxu0 0.0
    %730 = vmatpush1.msra.mxu0 0.0
    %731 = vmatprep.subr.mxu0 0.0
    %732 = vmatpush1.msra.mxu0 0.0
    %733 = vmatprep.subr.mxu0 0.0
    %734 = vmatpush1.msra.mxu0 0.0
    %735 = vmatprep.subr.mxu0 0.0
    %736 = vmatpush1.msra.mxu0 0.0
    %737 = vmatprep.subr.mxu0 0.0
    %738 = vmatpush1.msra.mxu0 0.0
    %739 = vmatprep.subr.mxu0 0.0
    %740 = vmatpush1.msra.mxu0 0.0
    %741 = vmatprep.subr.mxu0 0.0
    %742 = vmatpush1.msra.mxu0 0.0
    %743 = vmatprep.subr.mxu0 0.0
    %744 = vmatpush1.msra.mxu0 0.0
    %745 = vmatprep.subr.mxu0 0.0
    %746 = vmatpush1.msra.mxu0 0.0
    %747 = vmatprep.subr.mxu0 0.0
    %748 = vmatpush1.msra.mxu0 0.0
    %749 = vmatprep.subr.mxu0 0.0
    %750 = vmatpush1.msra.mxu0 0.0
    %751 = vmatprep.subr.mxu0 0.0
    %752 = vmatpush1.msra.mxu0 0.0
    %753 = vmatprep.subr.mxu0 0.0
    %754 = vmatpush1.msra.mxu0 0.0
    %755 = vmatprep.subr.mxu0 0.0
    %756 = vmatpush1.msra.mxu0 0.0
    %757 = vmatprep.mubr.f32.mxu0 0.0
    %758 = vmatmul.mubr.f32.gmra.mrb[0].mxu0 %v688
    %v759 = vpop.f32.mrb[0].mxu0
    %v760 = vadd.f32 0.0, %v759
    %v761 = vpop.f32.mrb[0].mxu0
    %762 = vmatprep.mubr.f32.mxu0 0.0
    %763 = vmatmul.mubr.f32.gmra.mrb[0].mxu0 %v691
    %v764 = vpop.f32.mrb[0].mxu0
    %v765 = vadd.f32 0.0, %v764
    %v766 = vpop.f32.mrb[0].mxu0
    %767 = vdwg.mxu0
    %770 = vrot.lane.b32.xlu0 %v760, 16
    %v771 = vpop.permute.xlu0 %770
    %772 = vrot.lane.b32.xlu0 %v765, 16
    %v773 = vpop.permute.xlu0 %772
    %vm776 = vcmask 195712
    %777 = vst.msk [vmem:[#allocation2] sm:$0xff] %vm776, %v771
    %778 = vst.msk [vmem:[#allocation2 + $0x8] sm:$0xff] %vm776, %v773
    %779 = vrot.lane.b32.xlu0 %v147, 104
    %v780 = vpop.permute.xlu0 %779
    %781 = vrot.lane.b32.xlu0 %v152, 104
    %v782 = vpop.permute.xlu0 %781
    %783 = vrot.lane.b32.xlu0 %v147, 72
    %v784 = vpop.permute.xlu0 %783
    %785 = vrot.lane.b32.xlu0 %v152, 72
    %v786 = vpop.permute.xlu0 %785
    %v787 = vsel %vm161, %v780, 0
    %v789 = vsel %vm161, %v782, 0
    %v791 = vsel %vm161, %v784, 0
    %v793 = vsel %vm161, %v786, 0
    %795 = vmatprep.subr.mxu0 0.0
    %796 = vmatpush1.xpose.msra.mxu0 %v791
    %797 = vmatprep.subr.mxu0 0.0
    %798 = vmatpush1.xpose.msra.mxu0 %v793
    %799 = vmatprep.subr.mxu0 0.0
    %800 = vmatpush1.xpose.msra.mxu0 0.0
    %801 = vmatprep.subr.mxu0 0.0
    %802 = vmatpush1.xpose.msra.mxu0 0.0
    %803 = vmatprep.subr.mxu0 0.0
    %804 = vmatpush1.xpose.msra.mxu0 0.0
    %805 = vmatprep.subr.mxu0 0.0
    %806 = vmatpush1.xpose.msra.mxu0 0.0
    %807 = vmatprep.subr.mxu0 0.0
    %808 = vmatpush1.xpose.msra.mxu0 0.0
    %809 = vmatprep.subr.mxu0 0.0
    %810 = vmatpush1.xpose.msra.mxu0 0.0
    %811 = vmatprep.subr.mxu0 0.0
    %812 = vmatpush1.xpose.msra.mxu0 0.0
    %813 = vmatprep.subr.mxu0 0.0
    %814 = vmatpush1.xpose.msra.mxu0 0.0
    %815 = vmatprep.subr.mxu0 0.0
    %816 = vmatpush1.xpose.msra.mxu0 0.0
    %817 = vmatprep.subr.mxu0 0.0
    %818 = vmatpush1.xpose.msra.mxu0 0.0
    %819 = vmatprep.subr.mxu0 0.0
    %820 = vmatpush1.xpose.msra.mxu0 0.0
    %821 = vmatprep.subr.mxu0 0.0
    %822 = vmatpush1.xpose.msra.mxu0 0.0
    %823 = vmatprep.subr.mxu0 0.0
    %824 = vmatpush1.xpose.msra.mxu0 0.0
    %825 = vmatprep.subr.mxu0 0.0
    %826 = vmatpush1.xpose.msra.mxu0 0.0
    %827 = vmatprep.subr.mxu0 0.0
    %828 = vmatpush1.xpose.msra.mxu0 0.0
    %829 = vmatprep.subr.mxu0 0.0
    %830 = vmatpush1.xpose.msra.mxu0 0.0
    %831 = vmatprep.subr.mxu0 0.0
    %832 = vmatpush1.xpose.msra.mxu0 0.0
    %833 = vmatprep.subr.mxu0 0.0
    %834 = vmatpush1.xpose.msra.mxu0 0.0
    %835 = vmatprep.subr.mxu0 0.0
    %836 = vmatpush1.xpose.msra.mxu0 0.0
    %837 = vmatprep.subr.mxu0 0.0
    %838 = vmatpush1.xpose.msra.mxu0 0.0
    %839 = vmatprep.subr.mxu0 0.0
    %840 = vmatpush1.xpose.msra.mxu0 0.0
    %841 = vmatprep.subr.mxu0 0.0
    %842 = vmatpush1.xpose.msra.mxu0 0.0
    %843 = vmatprep.subr.mxu0 0.0
    %844 = vmatpush1.xpose.msra.mxu0 0.0
    %845 = vmatprep.subr.mxu0 0.0
    %846 = vmatpush1.xpose.msra.mxu0 0.0
    %847 = vmatprep.subr.mxu0 0.0
    %848 = vmatpush1.xpose.msra.mxu0 0.0
    %849 = vmatprep.subr.mxu0 0.0
    %850 = vmatpush1.xpose.msra.mxu0 0.0
    %851 = vmatprep.subr.mxu0 0.0
    %852 = vmatpush1.xpose.msra.mxu0 0.0
    %853 = vmatprep.subr.mxu0 0.0
    %854 = vmatpush1.xpose.msra.mxu0 0.0
    %855 = vmatprep.subr.mxu0 0.0
    %856 = vmatpush1.xpose.msra.mxu0 0.0
    %857 = vmatprep.subr.mxu0 0.0
    %858 = vmatpush1.xpose.msra.mxu0 0.0
    %859 = vmatprep.mubr.f32.mxu0 0.0
    %860 = vmatmul.mubr.f32.gmra.mrb[0].mxu0 %v787
    %v861 = vpop.f32.mrb[0].mxu0
    %v862 = vadd.f32 %v60, %v861
    %v863 = vpop.f32.mrb[0].mxu0
    %864 = vmatprep.mubr.f32.mxu0 0.0
    %865 = vmatmul.mubr.f32.gmra.mrb[0].mxu0 %v789
    %v866 = vpop.f32.mrb[0].mxu0
    %v867 = vadd.f32 %v61, %v866
    %v868 = vpop.f32.mrb[0].mxu0
    %869 = vdwg.mxu0
    %v870 = vsel %vm245, %v862, -inf
    %871 = vmax.xlane.f32.xlu0 %v870
    %v872 = vpop.xlane.xlu0 %871
    %v873 = vsel %vm245, %v867, -inf
    %874 = vmax.xlane.f32.xlu0 %v873
    %v875 = vpop.xlane.xlu0 %874
    %v876 = vsub.f32 %v862, %v872
    %v877 = vsub.f32 %v867, %v875
    %v878 = vmul.f32 %v876, 1.442695
    %v879 = vpow.pop %v878
    %v880 = vmul.f32 %v877, 1.442695
    %v881 = vpow.pop %v880
    %v882 = vsel %vm245, %v879, 0.0
    %883 = vadd.xlane.f32.xlu0 %v882
    %v884 = vpop.xlane.xlu0 %883
    %v885 = vsel %vm245, %v881, 0.0
    %886 = vadd.xlane.f32.xlu0 %v885
    %v887 = vpop.xlane.xlu0 %886
    %v888 = vrcp.pop %v884
    %v889 = vmul.f32 %v879, %v888
    %v890 = vrcp.pop %v887
    %v891 = vmul.f32 %v881, %v890
    %892 = vrot.lane.b32.xlu0 %v147, 40
    %v893 = vpop.permute.xlu0 %892
    %894 = vrot.lane.b32.xlu0 %v152, 40
    %v895 = vpop.permute.xlu0 %894
    %v899 = vsel %vm245, %v889, 0
    %v902 = vsel %vm245, %v891, 0
    %904 = vmatprep.subr.mxu0 0.0
    %905 = vmatpush1.msra.mxu0 %v893
    %906 = vmatprep.subr.mxu0 0.0
    %907 = vmatpush1.msra.mxu0 %v895
    %908 = vmatprep.subr.mxu0 0.0
    %909 = vmatpush1.msra.mxu0 0.0
    %910 = vmatprep.subr.mxu0 0.0
    %911 = vmatpush1.msra.mxu0 0.0
    %912 = vmatprep.subr.mxu0 0.0
    %913 = vmatpush1.msra.mxu0 0.0
    %914 = vmatprep.subr.mxu0 0.0
    %915 = vmatpush1.msra.mxu0 0.0
    %916 = vmatprep.subr.mxu0 0.0
    %917 = vmatpush1.msra.mxu0 0.0
    %918 = vmatprep.subr.mxu0 0.0
    %919 = vmatpush1.msra.mxu0 0.0
    %920 = vmatprep.subr.mxu0 0.0
    %921 = vmatpush1.msra.mxu0 0.0
    %922 = vmatprep.subr.mxu0 0.0
    %923 = vmatpush1.msra.mxu0 0.0
    %924 = vmatprep.subr.mxu0 0.0
    %925 = vmatpush1.msra.mxu0 0.0
    %926 = vmatprep.subr.mxu0 0.0
    %927 = vmatpush1.msra.mxu0 0.0
    %928 = vmatprep.subr.mxu0 0.0
    %929 = vmatpush1.msra.mxu0 0.0
    %930 = vmatprep.subr.mxu0 0.0
    %931 = vmatpush1.msra.mxu0 0.0
    %932 = vmatprep.subr.mxu0 0.0
    %933 = vmatpush1.msra.mxu0 0.0
    %934 = vmatprep.subr.mxu0 0.0
    %935 = vmatpush1.msra.mxu0 0.0
    %936 = vmatprep.subr.mxu0 0.0
    %937 = vmatpush1.msra.mxu0 0.0
    %938 = vmatprep.subr.mxu0 0.0
    %939 = vmatpush1.msra.mxu0 0.0
    %940 = vmatprep.subr.mxu0 0.0
    %941 = vmatpush1.msra.mxu0 0.0
    %942 = vmatprep.subr.mxu0 0.0
    %943 = vmatpush1.msra.mxu0 0.0
    %944 = vmatprep.subr.mxu0 0.0
    %945 = vmatpush1.msra.mxu0 0.0
    %946 = vmatprep.subr.mxu0 0.0
    %947 = vmatpush1.msra.mxu0 0.0
    %948 = vmatprep.subr.mxu0 0.0
    %949 = vmatpush1.msra.mxu0 0.0
    %950 = vmatprep.subr.mxu0 0.0
    %951 = vmatpush1.msra.mxu0 0.0
    %952 = vmatprep.subr.mxu0 0.0
    %953 = vmatpush1.msra.mxu0 0.0
    %954 = vmatprep.subr.mxu0 0.0
    %955 = vmatpush1.msra.mxu0 0.0
    %956 = vmatprep.subr.mxu0 0.0
    %957 = vmatpush1.msra.mxu0 0.0
    %958 = vmatprep.subr.mxu0 0.0
    %959 = vmatpush1.msra.mxu0 0.0
    %960 = vmatprep.subr.mxu0 0.0
    %961 = vmatpush1.msra.mxu0 0.0
    %962 = vmatprep.subr.mxu0 0.0
    %963 = vmatpush1.msra.mxu0 0.0
    %964 = vmatprep.subr.mxu0 0.0
    %965 = vmatpush1.msra.mxu0 0.0
    %966 = vmatprep.subr.mxu0 0.0
    %967 = vmatpush1.msra.mxu0 0.0
    %968 = vmatprep.mubr.f32.mxu0 0.0
    %969 = vmatmul.mubr.f32.gmra.mrb[0].mxu0 %v899
    %v970 = vpop.f32.mrb[0].mxu0
    %v971 = vadd.f32 0.0, %v970
    %v972 = vpop.f32.mrb[0].mxu0
    %973 = vmatprep.mubr.f32.mxu0 0.0
    %974 = vmatmul.mubr.f32.gmra.mrb[0].mxu0 %v902
    %v975 = vpop.f32.mrb[0].mxu0
    %v976 = vadd.f32 0.0, %v975
    %v977 = vpop.f32.mrb[0].mxu0
    %978 = vdwg.mxu0
    %981 = vrot.lane.b32.xlu0 %v971, 24
    %v982 = vpop.permute.xlu0 %981
    %983 = vrot.lane.b32.xlu0 %v976, 24
    %v984 = vpop.permute.xlu0 %983
    %vm987 = vcmask 261312
    %988 = vst.msk [vmem:[#allocation2] sm:$0xff] %vm987, %v982
    %989 = vst.msk [vmem:[#allocation2 + $0x8] sm:$0xff] %vm987, %v984
    %v990 = vld [vmem:[#allocation2] sm:$0xff]
    %v991 = vld [vmem:[#allocation2 + $0x8] sm:$0xff]
    %v992 = vld [vmem:[%s3] sm:$0xff]
    %v993 = vld [vmem:[%s3 + $0x8] sm:$0xff]
    %v994 = vld [vmem:[%s3 + $0x10] sm:$0xff]
    %v995 = vld [vmem:[%s3 + $0x18] sm:$0xff]
    %v996 = vld [vmem:[%s4] sm:$0x1]
    %v998 = vlaneseq
    %v999 = vshrl.u32 %v998, 7
    %v1000 = vsub.s32 0, %v999
    %v1001 = vrot.slane %v996, %v1000
    %v1004 = vsel %vm73, %v990, 0
    %v1007 = vsel %vm73, %v991, 0
    %1009 = vmatprep.subr.mxu0 0.0
    %1010 = vmatpush1.msra.mxu0 %v992
    %1011 = vmatprep.subr.mxu0 0.0
    %1012 = vmatpush1.msra.mxu0 %v993
    %1013 = vmatprep.subr.mxu0 0.0
    %1014 = vmatpush1.msra.mxu0 %v994
    %1015 = vmatprep.subr.mxu0 0.0
    %1016 = vmatpush1.msra.mxu0 %v995
    %1017 = vmatprep.subr.mxu0 0.0
    %1018 = vmatpush1.msra.mxu0 0.0
    %1019 = vmatprep.subr.mxu0 0.0
    %1020 = vmatpush1.msra.mxu0 0.0
    %1021 = vmatprep.subr.mxu0 0.0
    %1022 = vmatpush1.msra.mxu0 0.0
    %1023 = vmatprep.subr.mxu0 0.0
    %1024 = vmatpush1.msra.mxu0 0.0
    %1025 = vmatprep.subr.mxu0 0.0
    %1026 = vmatpush1.msra.mxu0 0.0
    %1027 = vmatprep.subr.mxu0 0.0
    %1028 = vmatpush1.msra.mxu0 0.0
    %1029 = vmatprep.subr.mxu0 0.0
    %1030 = vmatpush1.msra.mxu0 0.0
    %1031 = vmatprep.subr.mxu0 0.0
    %1032 = vmatpush1.msra.mxu0 0.0
    %1033 = vmatprep.subr.mxu0 0.0
    %1034 = vmatpush1.msra.mxu0 0.0
    %1035 = vmatprep.subr.mxu0 0.0
    %1036 = vmatpush1.msra.mxu0 0.0
    %1037 = vmatprep.subr.mxu0 0.0
    %1038 = vmatpush1.msra.mxu0 0.0
    %1039 = vmatprep.subr.mxu0 0.0
    %1040 = vmatpush1.msra.mxu0 0.0
    %1041 = vmatprep.subr.mxu0 0.0
    %1042 = vmatpush1.msra.mxu0 0.0
    %1043 = vmatprep.subr.mxu0 0.0
    %1044 = vmatpush1.msra.mxu0 0.0
    %1045 = vmatprep.subr.mxu0 0.0
    %1046 = vmatpush1.msra.mxu0 0.0
    %1047 = vmatprep.subr.mxu0 0.0
    %1048 = vmatpush1.msra.mxu0 0.0
    %1049 = vmatprep.subr.mxu0 0.0
    %1050 = vmatpush1.msra.mxu0 0.0
    %1051 = vmatprep.subr.mxu0 0.0
    %1052 = vmatpush1.msra.mxu0 0.0
    %1053 = vmatprep.subr.mxu0 0.0
    %1054 = vmatpush1.msra.mxu0 0.0
    %1055 = vmatprep.subr.mxu0 0.0
    %1056 = vmatpush1.msra.mxu0 0.0
    %1057 = vmatprep.subr.mxu0 0.0
    %1058 = vmatpush1.msra.mxu0 0.0
    %1059 = vmatprep.subr.mxu0 0.0
    %1060 = vmatpush1.msra.mxu0 0.0
    %1061 = vmatprep.subr.mxu0 0.0
    %1062 = vmatpush1.msra.mxu0 0.0
    %1063 = vmatprep.subr.mxu0 0.0
    %1064 = vmatpush1.msra.mxu0 0.0
    %1065 = vmatprep.subr.mxu0 0.0
    %1066 = vmatpush1.msra.mxu0 0.0
    %1067 = vmatprep.subr.mxu0 0.0
    %1068 = vmatpush1.msra.mxu0 0.0
    %1069 = vmatprep.subr.mxu0 0.0
    %1070 = vmatpush1.msra.mxu0 0.0
    %1071 = vmatprep.subr.mxu0 0.0
    %1072 = vmatpush1.msra.mxu0 0.0
    %1073 = vmatprep.mubr.f32.mxu0 0.0
    %1074 = vmatmul.mubr.f32.gmra.mrb[0].mxu0 %v1004
    %v1075 = vpop.f32.mrb[0].mxu0
    %v1076 = vadd.f32 %v1001, %v1075
    %v1077 = vpop.f32.mrb[0].mxu0
    %1078 = vmatprep.mubr.f32.mxu0 0.0
    %1079 = vmatmul.mubr.f32.gmra.mrb[0].mxu0 %v1007
    %v1080 = vpop.f32.mrb[0].mxu0
    %v1081 = vadd.f32 %v1001, %v1080
    %v1082 = vpop.f32.mrb[0].mxu0
    %1083 = vdwg.mxu0
    %v1084 = vadd.f32 %v56, %v1076
    %v1085 = vadd.f32 %v57, %v1081
    %v1086 = vsel %vm73, %v1084, 0.0
    %1087 = vadd.xlane.f32.xlu0 %v1086
    %v1088 = vpop.xlane.xlu0 %1087
    %v1089 = vsel %vm73, %v1085, 0.0
    %1090 = vadd.xlane.f32.xlu0 %v1089
    %v1091 = vpop.xlane.xlu0 %1090
    %v1092 = vrcp.pop 32.0
    %v1093 = vmul.f32 %v1088, %v1092
    %v1094 = vmul.f32 %v1091, %v1092
    %v1095 = vsub.f32 %v1084, %v1093
    %v1096 = vsub.f32 %v1085, %v1094
    %v1097 = vmul.f32 %v1095, %v1095
    %v1098 = vmul.f32 %v1096, %v1096
    %v1099 = vsel %vm73, %v1097, 0.0
    %1100 = vadd.xlane.f32.xlu0 %v1099
    %v1101 = vpop.xlane.xlu0 %1100
    %v1102 = vsel %vm73, %v1098, 0.0
    %1103 = vadd.xlane.f32.xlu0 %v1102
    %v1104 = vpop.xlane.xlu0 %1103
    %v1105 = vmul.f32 %v1101, %v1092
    %v1106 = vmul.f32 %v1104, %v1092
    %v1107 = vadd.f32 %v1105, 1e-05
    %v1108 = vadd.f32 %v1106, 1e-05
    %v1109 = vrsqrt.pop %v1107
    %v1110 = vrsqrt.pop %v1108
    %v1111 = vmul.f32 %v1095, %v1109
    %v1112 = vmul.f32 %v1096, %v1110
    %v1114 = vlaneseq
    %v1115 = vshrl.u32 %v1114, 7
    %v1116 = vsub.s32 0, %v1115
    %v1117 = vrot.slane %v58, %v1116
    %v1119 = vmul.f32 %v1111, %v1117
    %v1120 = vmul.f32 %v1112, %v1117
    %v1122 = vlaneseq
    %v1123 = vshrl.u32 %v1122, 7
    %v1124 = vsub.s32 0, %v1123
    %v1125 = vrot.slane %v59, %v1124
    %v1127 = vadd.f32 %v1119, %v1125
    %v1128 = vadd.f32 %v1120, %v1125
    %v1129 = vld [vmem:[%s5] sm:$0xff]
    %v1130 = vld [vmem:[%s5 + $0x8] sm:$0xff]
    %v1131 = vld [vmem:[%s5 + $0x10] sm:$0xff]
    %v1132 = vld [vmem:[%s5 + $0x18] sm:$0xff]
    %v1133 = vld [vmem:[%s6] sm:$0x1]
    %v1135 = vlaneseq
    %v1136 = vshrl.u32 %v1135, 7
    %v1137 = vsub.s32 0, %v1136
    %v1138 = vrot.slane %v1133, %v1137
    %v1141 = vsel %vm73, %v1127, 0
    %v1144 = vsel %vm73, %v1128, 0
    %1146 = vmatprep.subr.mxu0 0.0
    %1147 = vmatpush1.msra.mxu0 %v1129
    %1148 = vmatprep.subr.mxu0 0.0
    %1149 = vmatpush1.msra.mxu0 %v1130
    %1150 = vmatprep.subr.mxu0 0.0
    %1151 = vmatpush1.msra.mxu0 %v1131
    %1152 = vmatprep.subr.mxu0 0.0
    %1153 = vmatpush1.msra.mxu0 %v1132
    %1154 = vmatprep.subr.mxu0 0.0
    %1155 = vmatpush1.msra.mxu0 0.0
    %1156 = vmatprep.subr.mxu0 0.0
    %1157 = vmatpush1.msra.mxu0 0.0
    %1158 = vmatprep.subr.mxu0 0.0
    %1159 = vmatpush1.msra.mxu0 0.0
    %1160 = vmatprep.subr.mxu0 0.0
    %1161 = vmatpush1.msra.mxu0 0.0
    %1162 = vmatprep.subr.mxu0 0.0
    %1163 = vmatpush1.msra.mxu0 0.0
    %1164 = vmatprep.subr.mxu0 0.0
    %1165 = vmatpush1.msra.mxu0 0.0
    %1166 = vmatprep.subr.mxu0 0.0
    %1167 = vmatpush1.msra.mxu0 0.0
    %1168 = vmatprep.subr.mxu0 0.0
    %1169 = vmatpush1.msra.mxu0 0.0
    %1170 = vmatprep.subr.mxu0 0.0
    %1171 = vmatpush1.msra.mxu0 0.0
    %1172 = vmatprep.subr.mxu0 0.0
    %1173 = vmatpush1.msra.mxu0 0.0
    %1174 = vmatprep.subr.mxu0 0.0
    %1175 = vmatpush1.msra.mxu0 0.0
    %1176 = vmatprep.subr.mxu0 0.0
    %1177 = vmatpush1.msra.mxu0 0.0
    %1178 = vmatprep.subr.mxu0 0.0
    %1179 = vmatpush1.msra.mxu0 0.0
    %1180 = vmatprep.subr.mxu0 0.0
    %1181 = vmatpush1.msra.mxu0 0.0
    %1182 = vmatprep.subr.mxu0 0.0
    %1183 = vmatpush1.msra.mxu0 0.0
    %1184 = vmatprep.subr.mxu0 0.0
    %1185 = vmatpush1.msra.mxu0 0.0
    %1186 = vmatprep.subr.mxu0 0.0
    %1187 = vmatpush1.msra.mxu0 0.0
    %1188 = vmatprep.subr.mxu0 0.0
    %1189 = vmatpush1.msra.mxu0 0.0
    %1190 = vmatprep.subr.mxu0 0.0
    %1191 = vmatpush1.msra.mxu0 0.0
    %1192 = vmatprep.subr.mxu0 0.0
    %1193 = vmatpush1.msra.mxu0 0.0
    %1194 = vmatprep.subr.mxu0 0.0
    %1195 = vmatpush1.msra.mxu0 0.0
    %1196 = vmatprep.subr.mxu0 0.0
    %1197 = vmatpush1.msra.mxu0 0.0
    %1198 = vmatprep.subr.mxu0 0.0
    %1199 = vmatpush1.msra.mxu0 0.0
    %1200 = vmatprep.subr.mxu0 0.0
    %1201 = vmatpush1.msra.mxu0 0.0
    %1202 = vmatprep.subr.mxu0 0.0
    %1203 = vmatpush1.msra.mxu0 0.0
    %1204 = vmatprep.subr.mxu0 0.0
    %1205 = vmatpush1.msra.mxu0 0.0
    %1206 = vmatprep.subr.mxu0 0.0
    %1207 = vmatpush1.msra.mxu0 0.0
    %1208 = vmatprep.subr.mxu0 0.0
    %1209 = vmatpush1.msra.mxu0 0.0
    %1210 = vmatprep.mubr.f32.mxu0 0.0
    %1211 = vmatmul.mubr.f32.gmra.mrb[0].mxu0 %v1141
    %v1212 = vpop.f32.mrb[0].mxu0
    %v1213 = vadd.f32 %v1138, %v1212
    %v1214 = vpop.f32.mrb[0].mxu0
    %1215 = vmatprep.mubr.f32.mxu0 0.0
    %1216 = vmatmul.mubr.f32.gmra.mrb[0].mxu0 %v1144
    %v1217 = vpop.f32.mrb[0].mxu0
    %v1218 = vadd.f32 %v1138, %v1217
    %v1219 = vpop.f32.mrb[0].mxu0
    %1220 = vdwg.mxu0
    %v1221 = vmax.f32 %v1213, 0.0
    %v1222 = vmax.f32 %v1218, 0.0
    %v1223 = vld [vmem:[%s7] sm:$0xff]
    %v1224 = vld [vmem:[%s7 + $0x8] sm:$0xff]
    %v1225 = vld [vmem:[%s7 + $0x10] sm:$0xff]
    %v1226 = vld [vmem:[%s7 + $0x18] sm:$0xff]
    %v1227 = vld [vmem:[%s7 + $0x20] sm:$0xff]
    %v1228 = vld [vmem:[%s7 + $0x28] sm:$0xff]
    %v1229 = vld [vmem:[%s7 + $0x30] sm:$0xff]
    %v1230 = vld [vmem:[%s7 + $0x38] sm:$0xff]
    %v1231 = vld [vmem:[%s8] sm:$0x1]
    %v1233 = vlaneseq
    %v1234 = vshrl.u32 %v1233, 7
    %v1235 = vsub.s32 0, %v1234
    %v1236 = vrot.slane %v1231, %v1235
    %vm1238 = vcmask 523264
    %v1240 = vsel %vm1238, %v1221, 0
    %v1243 = vsel %vm1238, %v1222, 0
    %1245 = vmatprep.subr.mxu0 0.0
    %1246 = vmatpush1.msra.mxu0 %v1223
    %1247 = vmatprep.subr.mxu0 0.0
    %1248 = vmatpush1.msra.mxu0 %v1224
    %1249 = vmatprep.subr.mxu0 0.0
    %1250 = vmatpush1.msra.mxu0 %v1225
    %1251 = vmatprep.subr.mxu0 0.0
    %1252 = vmatpush1.msra.mxu0 %v1226
    %1253 = vmatprep.subr.mxu0 0.0
    %1254 = vmatpush1.msra.mxu0 %v1227
    %1255 = vmatprep.subr.mxu0 0.0
    %1256 = vmatpush1.msra.mxu0 %v1228
    %1257 = vmatprep.subr.mxu0 0.0
    %1258 = vmatpush1.msra.mxu0 %v1229
    %1259 = vmatprep.subr.mxu0 0.0
    %1260 = vmatpush1.msra.mxu0 %v1230
    %1261 = vmatprep.subr.mxu0 0.0
    %1262 = vmatpush1.msra.mxu0 0.0
    %1263 = vmatprep.subr.mxu0 0.0
    %1264 = vmatpush1.msra.mxu0 0.0
    %1265 = vmatprep.subr.mxu0 0.0
    %1266 = vmatpush1.msra.mxu0 0.0
    %1267 = vmatprep.subr.mxu0 0.0
    %1268 = vmatpush1.msra.mxu0 0.0
    %1269 = vmatprep.subr.mxu0 0.0
    %1270 = vmatpush1.msra.mxu0 0.0
    %1271 = vmatprep.subr.mxu0 0.0
    %1272 = vmatpush1.msra.mxu0 0.0
    %1273 = vmatprep.subr.mxu0 0.0
    %1274 = vmatpush1.msra.mxu0 0.0
    %1275 = vmatprep.subr.mxu0 0.0
    %1276 = vmatpush1.msra.mxu0 0.0
    %1277 = vmatprep.subr.mxu0 0.0
    %1278 = vmatpush1.msra.mxu0 0.0
    %1279 = vmatprep.subr.mxu0 0.0
    %1280 = vmatpush1.msra.mxu0 0.0
    %1281 = vmatprep.subr.mxu0 0.0
    %1282 = vmatpush1.msra.mxu0 0.0
    %1283 = vmatprep.subr.mxu0 0.0
    %1284 = vmatpush1.msra.mxu0 0.0
    %1285 = vmatprep.subr.mxu0 0.0
    %1286 = vmatpush1.msra.mxu0 0.0
    %1287 = vmatprep.subr.mxu0 0.0
    %1288 = vmatpush1.msra.mxu0 0.0
    %1289 = vmatprep.subr.mxu0 0.0
    %1290 = vmatpush1.msra.mxu0 0.0
    %1291 = vmatprep.subr.mxu0 0.0
    %1292 = vmatpush1.msra.mxu0 0.0
    %1293 = vmatprep.subr.mxu0 0.0
    %1294 = vmatpush1.msra.mxu0 0.0
    %1295 = vmatprep.subr.mxu0 0.0
    %1296 = vmatpush1.msra.mxu0 0.0
    %1297 = vmatprep.subr.mxu0 0.0
    %1298 = vmatpush1.msra.mxu0 0.0
    %1299 = vmatprep.subr.mxu0 0.0
    %1300 = vmatpush1.msra.mxu0 0.0
    %1301 = vmatprep.subr.mxu0 0.0
    %1302 = vmatpush1.msra.mxu0 0.0
    %1303 = vmatprep.subr.mxu0 0.0
    %1304 = vmatpush1.msra.mxu0 0.0
    %1305 = vmatprep.subr.mxu0 0.0
    %1306 = vmatpush1.msra.mxu0 0.0
    %1307 = vmatprep.subr.mxu0 0.0
    %1308 = vmatpush1.msra.mxu0 0.0
    %1309 = vmatprep.mubr.f32.mxu0 0.0
    %1310 = vmatmul.mubr.f32.gmra.mrb[0].mxu0 %v1240
    %v1311 = vpop.f32.mrb[0].mxu0
    %v1312 = vadd.f32 %v1236, %v1311
    %v1313 = vpop.f32.mrb[0].mxu0
    %1314 = vmatprep.mubr.f32.mxu0 0.0
    %1315 = vmatmul.mubr.f32.gmra.mrb[0].mxu0 %v1243
    %v1316 = vpop.f32.mrb[0].mxu0
    %v1317 = vadd.f32 %v1236, %v1316
    %v1318 = vpop.f32.mrb[0].mxu0
    %1319 = vdwg.mxu0
    %v1320 = vadd.f32 %v1127, %v1312
    %v1321 = vadd.f32 %v1128, %v1317
    %v1322 = vsel %vm73, %v1320, 0.0
    %1323 = vadd.xlane.f32.xlu0 %v1322
    %v1324 = vpop.xlane.xlu0 %1323
    %v1325 = vsel %vm73, %v1321, 0.0
    %1326 = vadd.xlane.f32.xlu0 %v1325
    %v1327 = vpop.xlane.xlu0 %1326
    %v1328 = vmul.f32 %v1324, %v1092
    %v1329 = vmul.f32 %v1327, %v1092
    %v1330 = vsub.f32 %v1320, %v1328
    %v1331 = vsub.f32 %v1321, %v1329
    %v1332 = vmul.f32 %v1330, %v1330
    %v1333 = vmul.f32 %v1331, %v1331
    %v1334 = vsel %vm73, %v1332, 0.0
    %1335 = vadd.xlane.f32.xlu0 %v1334
    %v1336 = vpop.xlane.xlu0 %1335
    %v1337 = vsel %vm73, %v1333, 0.0
    %1338 = vadd.xlane.f32.xlu0 %v1337
    %v1339 = vpop.xlane.xlu0 %1338
    %v1340 = vmul.f32 %v1336, %v1092
    %v1341 = vmul.f32 %v1339, %v1092
    %v1342 = vadd.f32 %v1340, 1e-05
    %v1343 = vadd.f32 %v1341, 1e-05
    %v1344 = vrsqrt.pop %v1342
    %v1345 = vrsqrt.pop %v1343
    %v1346 = vmul.f32 %v1330, %v1344
    %v1347 = vmul.f32 %v1331, %v1345
    %v1348 = vmul.f32 %v1346, %v1117
    %v1349 = vmul.f32 %v1347, %v1117
    %v1350 = vadd.f32 %v1348, %v1125
    %v1351 = vadd.f32 %v1349, %v1125
    %1352 = vst.msk [vmem:[#allocation6] sm:$0xff] %vm73, %v1350
    %1353 = vst.msk [vmem:[#allocation6 + $0x8] sm:$0xff] %vm73, %v1351
    // Predicated region
    $region54: #{tpu_custom_call.1} parent=1 // pred_check
      _
    $region55: #{tpu_custom_call.1} parent=1 // pred_check_branch
      %1355 = sbr.rel (0) target = $region57
    $region56: #{tpu_custom_call.1} parent=1 // pred_region
      %s1357 = ssub.s32 256, 256
      %1358 = vsyncadd [#allocation5], %s1357
      %s1359 = sshll.u32 [#allocation6], 4
      %s1360 = int_to_ptr.vmem [resolvable:$true] %s1359
      %1365 = dma.vmem_to_hbm [thread:$0]  %s1360, 256, %s12, [#allocation5], 128, 128, 8
    $region57: #{tpu_custom_call.1} parent=1 // pred_fallthru
      _
    // Predicated region
    $region58: #{tpu_custom_call.1} parent=1 // pred_check
      _
    $region59: #{tpu_custom_call.1} parent=1 // pred_check_branch
      %1367 = sbr.rel (0) target = $region61
    $region60: #{tpu_custom_call.1} parent=1 // pred_region
      %1368 = dma.done [#allocation5], 256
    $region61: #{tpu_custom_call.1} parent=1 // pred_fallthru
      _
    %1369 = vsyncpa [#allocation4], 1
    %1370 = vsyncpa [#allocation5], 1

</llo_original>
